<compile_context>
chip_gen: v6e
topology: v6e:2x2x1
jax: 0.10.0
libtpu: 0.0.40
codegen_flags: <defaults>
</compile_context>

<pallas_src>
import functools

import jax
import jax.numpy as jnp
import numpy as np
from jax.experimental import pallas as pl
from jax.experimental.pallas import tpu as pltpu


# ---------------------------------------------------------------------------
# Fused Pallas kernel: encoders + 2-layer hetero SAGE + edge classifier
# ---------------------------------------------------------------------------
def _full_spec(shape):
    n = len(shape)
    return pl.BlockSpec(shape, lambda i, *_: (0,) * n)


def _fused_forward_kernel(hidden, n_edges,
                          eidx_ref,                                  # SMEM (2, Ep)
                          movie_x_ref, x_user_ref, movie_emb_ref,
                          a_um_ref, a_mu_ref,
                          mlw_ref, mlb_ref,
                          w1u_ref, w1m_ref, b1um_ref, b1mu_ref,
                          w2u_ref, w2m_ref, b2um_ref, b2mu_ref,
                          o_ref,
                          hu_s, hm_s, gu_s, gm_s):
    f32 = jnp.float32
    bf16 = jnp.bfloat16
    h = hidden

    def mxu(a, b):
        # bf16 operands, f32 accumulation (single MXU pass on all generations).
        return jnp.dot(a.astype(bf16), b.astype(bf16), preferred_element_type=f32)

    # ---- input encoders (all VMEM-resident) -------------------------------
    x_user = x_user_ref[...]                                         # (Nu, H) f32
    x_movie = mxu(movie_x_ref[...], mlw_ref[...]) + mlb_ref[...] + movie_emb_ref[...]

    a_um = a_um_ref[...]                                             # (Nm, Nu) bf16
    a_mu = a_mu_ref[...]                                             # (Nu, Nm) bf16

    def hetero_layer(xu, xm, wu_ref, wm_ref, bum_ref, bmu_ref, relu):
        # SAGEConv(aggr='mean'), re-associated:  A @ (x_src @ Wl) + x_dst @ Wr + b
        # Shared-LHS fusion: one N=2H matmul per node type, lane slices after.
        y_u = mxu(xu, wu_ref[...])           # (Nu, 2H): [xu@Wl_um | xu@Wr_mu]
        y_m = mxu(xm, wm_ref[...])           # (Nm, 2H): [xm@Wl_mu | xm@Wr_um]
        hm = mxu(a_um, y_u[:, :h]) + y_m[:, h:] + bum_ref[...]       # (Nm, H)
        hu = mxu(a_mu, y_m[:, :h]) + y_u[:, h:] + bmu_ref[...]       # (Nu, H)
        if relu:
            hm = jnp.maximum(hm, 0.0)
            hu = jnp.maximum(hu, 0.0)
        return hu, hm

    # ---- hetero GNN layer 1 (ReLU) / layer 2 (no activation) --------------
    h_user1, h_movie1 = hetero_layer(x_user, x_movie,
                                     w1u_ref, w1m_ref, b1um_ref, b1mu_ref, True)
    h_user2, h_movie2 = hetero_layer(h_user1, h_movie1,
                                     w2u_ref, w2m_ref, b2um_ref, b2mu_ref, False)

    # ---- classifier: gather edge endpoints via SMEM indices ----------------
    # Lane-dense (1, Ep) output; no one-hot selection matmuls, no (E,1) stores.
    hu_s[...] = h_user2
    hm_s[...] = h_movie2
    gu_s[...] = jnp.zeros_like(gu_s)        # padded edges -> zero score (sliced off)
    gm_s[...] = jnp.zeros_like(gm_s)

    @pl.loop(0, n_edges)
    def _(e):
        ui = eidx_ref[0, e]
        mi = eidx_ref[1, e]
        gu_s[pl.ds(e, 1), :] = hu_s[pl.ds(ui, 1), :]
        gm_s[pl.ds(e, 1), :] = hm_s[pl.ds(mi, 1), :]

    prod = gu_s[...] * gm_s[...]                                     # (Ep, H) f32
    ones_row = jnp.ones((1, h), f32)
    # (1,H) . (Ep,H)^T -> (1,Ep): edge axis lands on lanes, one full-width vst.
    o_ref[...] = jax.lax.dot_general(
        ones_row, prod, (((1,), (1,)), ((), ())), preferred_element_type=f32)


# ---------------------------------------------------------------------------
# Glue (plain JAX): adjacency construction, embedding gathers, parameters
# ---------------------------------------------------------------------------
def mean_adjacency(src_idx, dst_idx, num_src, num_dst):
    # A[dst, src] = (#edges dst<-src) / deg(dst); A @ x_src == scatter-mean.
    a = jnp.zeros((num_dst, num_src), jnp.float32).at[dst_idx, src_idx].add(1.0)
    deg = jnp.sum(a, axis=1, keepdims=True)
    return a / jnp.maximum(deg, 1.0)


def prepare_graph(edge_index_um, edge_label_index, n_user, n_movie):
    """Amortizable per-graph prep: dense mean-adjacencies (bf16) + padded edge ids."""
    a_um = mean_adjacency(edge_index_um[0], edge_index_um[1],
                          n_user, n_movie).astype(jnp.bfloat16)      # (Nm, Nu)
    a_mu = mean_adjacency(edge_index_um[1], edge_index_um[0],
                          n_movie, n_user).astype(jnp.bfloat16)      # (Nu, Nm)
    e = int(edge_label_index.shape[1])
    e_pad = max(128, ((e + 127) // 128) * 128)
    pad = jnp.zeros((2, e_pad - e), jnp.int32)                       # valid idx 0, sliced off
    eidx = jnp.concatenate([edge_label_index.astype(jnp.int32), pad], axis=1)
    return a_um, a_mu, eidx, e, e_pad


def init_params(key, num_users, num_movies, movie_feat, hidden):
    ks = jax.random.split(key, 6)
    s = 0.1

    def dense(k, shape):
        return s * jax.random.normal(k, shape, jnp.float32)

    def layer_w(k):
        k1, k2, k3, k4, k5, k6 = jax.random.split(k, 6)
        wl_um, wr_um = dense(k1, (hidden, hidden)), dense(k2, (hidden, hidden))
        wl_mu, wr_mu = dense(k3, (hidden, hidden)), dense(k4, (hidden, hidden))
        return {
            # shared-LHS stacking along the output (N) axis, (in, 2*out) layout
            "w_user": jnp.concatenate([wl_um, wr_mu], axis=1),   # (H, 2H)
            "w_movie": jnp.concatenate([wl_mu, wr_um], axis=1),  # (H, 2H)
            "b_um": dense(k5, (1, hidden)),
            "b_mu": dense(k6, (1, hidden)),
        }

    return {
        # stored pre-transposed: (in_features, out_features)
        "movie_lin_w": dense(ks[0], (movie_feat, hidden)),
        "movie_lin_b": dense(ks[1], (1, hidden)),
        "user_emb": dense(ks[2], (num_users, hidden)),
        "movie_emb": dense(ks[3], (num_movies, hidden)),
        "layer1": layer_w(ks[4]),
        "layer2": layer_w(ks[5]),
    }


def _vreg_padded_bytes(shape, dtype):
    itemsize = np.dtype(dtype).itemsize
    if len(shape) == 0:
        return 4
    if len(shape) == 1:
        r, c = 1, int(shape[0])
    else:
        r, c = int(np.prod(shape[:-1])), int(shape[-1])
    sub = 8 * max(1, 4 // itemsize)
    return (-(-r // sub) * sub) * (-(-c // 128) * 128) * itemsize


def model_forward(params, user_node_id, movie_x, movie_node_id, graph):
    p = params
    a_um, a_mu, eidx_pad, e, e_pad = graph

    # Embedding-table gathers stay in plain JAX (data-dependent gather over tables).
    x_user = p["user_emb"][user_node_id]                             # (Nu, H)
    movie_emb_g = p["movie_emb"][movie_node_id]                      # (Nm, H)
    n_user, n_movie = x_user.shape[0], movie_emb_g.shape[0]
    hidden = x_user.shape[1]

    args = (movie_x, x_user, movie_emb_g, a_um, a_mu,
            p["movie_lin_w"], p["movie_lin_b"],
            p["layer1"]["w_user"], p["layer1"]["w_movie"],
            p["layer1"]["b_um"], p["layer1"]["b_mu"],
            p["layer2"]["w_user"], p["layer2"]["w_movie"],
            p["layer2"]["b_um"], p["layer2"]["b_mu"])

    scratch_shapes = [
        pltpu.VMEM((n_user, hidden), jnp.float32),
        pltpu.VMEM((n_movie, hidden), jnp.float32),
        pltpu.VMEM((e_pad, hidden), jnp.float32),
        pltpu.VMEM((e_pad, hidden), jnp.float32),
    ]

    # VMEM budget from actual (vreg-padded) operand bytes, not a hard-coded constant.
    in_bytes = sum(_vreg_padded_bytes(a.shape, a.dtype) for a in args)
    out_bytes = _vreg_padded_bytes((1, e_pad), jnp.float32)
    scr_bytes = (_vreg_padded_bytes((n_user, hidden), jnp.float32)
                 + _vreg_padded_bytes((n_movie, hidden), jnp.float32)
                 + 2 * _vreg_padded_bytes((e_pad, hidden), jnp.float32))
    vmem_limit = 2 * (in_bytes + out_bytes) + scr_bytes + (2 << 20)
    vmem_limit = int(min(max(vmem_limit, 4 << 20), 64 << 20))

    flops = 2 * (n_movie * movie_x.shape[1] * hidden
                 + 2 * (n_user + n_movie) * hidden * 2 * hidden      # stacked dense transforms
                 + 2 * 2 * n_user * n_movie * hidden                 # A matmuls, both layers
                 + e_pad * hidden)                                   # classifier reduction
    bytes_accessed = (sum(int(a.size) * a.dtype.itemsize for a in args)
                      + eidx_pad.size * 4 + e_pad * 4)

    kernel = functools.partial(_fused_forward_kernel, hidden, e)

    out = pl.pallas_call(
        kernel,
        out_shape=jax.ShapeDtypeStruct((1, e_pad), jnp.float32),
        grid_spec=pltpu.PrefetchScalarGridSpec(
            num_scalar_prefetch=1,                                   # eidx_pad -> SMEM
            grid=(1,),
            in_specs=[_full_spec(a.shape) for a in args],
            out_specs=_full_spec((1, e_pad)),
            scratch_shapes=scratch_shapes),
        compiler_params=pltpu.CompilerParams(
            dimension_semantics=("arbitrary",),
            vmem_limit_bytes=vmem_limit),
        cost_estimate=pl.CostEstimate(flops=flops, transcendentals=0,
                                      bytes_accessed=bytes_accessed),
    )(eidx_pad, *args)
    return out[0, :e]


# Pure-JAX reference (for correctness sanity check)
def reference_forward(params, user_node_id, movie_x, movie_node_id,
                      edge_index_um, edge_label_index):
    hp = jax.lax.Precision.HIGHEST
    p = params
    h = p["user_emb"].shape[1]
    x_user = p["user_emb"][user_node_id]
    x_movie = (jnp.dot(movie_x, p["movie_lin_w"], precision=hp)
               + p["movie_lin_b"] + p["movie_emb"][movie_node_id])
    n_user, n_movie = x_user.shape[0], x_movie.shape[0]
    a_um = mean_adjacency(edge_index_um[0], edge_index_um[1], n_user, n_movie)
    a_mu = mean_adjacency(edge_index_um[1], edge_index_um[0], n_movie, n_user)

    def layer(lw, xu, xm, relu):
        wl_um, wr_mu = lw["w_user"][:, :h], lw["w_user"][:, h:]
        wl_mu, wr_um = lw["w_movie"][:, :h], lw["w_movie"][:, h:]
        hm = (jnp.dot(jnp.dot(a_um, xu, precision=hp), wl_um, precision=hp)
              + jnp.dot(xm, wr_um, precision=hp) + lw["b_um"])
        hu = (jnp.dot(jnp.dot(a_mu, xm, precision=hp), wl_mu, precision=hp)
              + jnp.dot(xu, wr_mu, precision=hp) + lw["b_mu"])
        if relu:
            hm, hu = jnp.maximum(hm, 0.0), jnp.maximum(hu, 0.0)
        return hu, hm

    hu1, hm1 = layer(p["layer1"], x_user, x_movie, True)
    hu2, hm2 = layer(p["layer2"], hu1, hm1, False)
    return jnp.sum(hu2[edge_label_index[0]] * hm2[edge_label_index[1]], axis=-1)


if __name__ == "__main__":
    hidden = 32
    num_users = 8
    num_movies = 16
    movie_feat = 20
    num_edges = 24
    num_label_edges = 8

    key = jax.random.PRNGKey(0)
    k_par, k_x, k_e0, k_e1, k_l0, k_l1 = jax.random.split(key, 6)

    params = init_params(k_par, num_users, num_movies, movie_feat, hidden)

    user_node_id = jnp.arange(num_users, dtype=jnp.int32)
    movie_node_id = jnp.arange(num_movies, dtype=jnp.int32)
    movie_x = jax.random.normal(k_x, (num_movies, movie_feat), jnp.float32)

    edge_index_um = jnp.stack([
        jax.random.randint(k_e0, (num_edges,), 0, num_users),
        jax.random.randint(k_e1, (num_edges,), 0, num_movies),
    ]).astype(jnp.int32)

    edge_label_index = jnp.stack([
        jax.random.randint(k_l0, (num_label_edges,), 0, num_users),
        jax.random.randint(k_l1, (num_label_edges,), 0, num_movies),
    ]).astype(jnp.int32)

    # Graph prep (dense A_norm + padded supervision indices) is computed once
    # and reused across steps for a static graph.
    graph = prepare_graph(edge_index_um, edge_label_index, num_users, num_movies)

    pred = model_forward(params, user_node_id, movie_x, movie_node_id, graph)
    pred = jax.block_until_ready(pred)

    ref = reference_forward(params, user_node_id, movie_x, movie_node_id,
                            edge_index_um, edge_label_index)
    np.testing.assert_allclose(np.asarray(pred), np.asarray(ref),
                               rtol=5e-2, atol=5e-2)

    print("KERNEL_OK")
</pallas_src>

<mosaic_0001>
module attributes {stable_mosaic.version = 11 : i64} {
  func.func @_fused_forward_kernel(%arg0: i32, %arg1: memref<2x128xi32, #tpu.memory_space<smem>>, %arg2: memref<16x20xf32, #tpu.memory_space<vmem>>, %arg3: memref<8x32xf32, #tpu.memory_space<vmem>>, %arg4: memref<16x32xf32, #tpu.memory_space<vmem>>, %arg5: memref<16x8xbf16, #tpu.memory_space<vmem>>, %arg6: memref<8x16xbf16, #tpu.memory_space<vmem>>, %arg7: memref<20x32xf32, #tpu.memory_space<vmem>>, %arg8: memref<1x32xf32, #tpu.memory_space<vmem>>, %arg9: memref<32x64xf32, #tpu.memory_space<vmem>>, %arg10: memref<32x64xf32, #tpu.memory_space<vmem>>, %arg11: memref<1x32xf32, #tpu.memory_space<vmem>>, %arg12: memref<1x32xf32, #tpu.memory_space<vmem>>, %arg13: memref<32x64xf32, #tpu.memory_space<vmem>>, %arg14: memref<32x64xf32, #tpu.memory_space<vmem>>, %arg15: memref<1x32xf32, #tpu.memory_space<vmem>>, %arg16: memref<1x32xf32, #tpu.memory_space<vmem>>, %arg17: memref<1x128xf32, #tpu.memory_space<vmem>>, %arg18: memref<8x32xf32, #tpu.memory_space<vmem>>, %arg19: memref<16x32xf32, #tpu.memory_space<vmem>>, %arg20: memref<128x32xf32, #tpu.memory_space<vmem>>, %arg21: memref<128x32xf32, #tpu.memory_space<vmem>>) attributes {dimension_semantics = [#tpu.dimension_semantics<arbitrary>], iteration_bounds = array<i64: 1>, scalar_prefetch = 1 : i64, scratch_operands = 4 : i64, tpu.core_type = #tpu.core_type<tc>, window_params = [{pipeline_mode = #tpu.pipeline_mode<synchronous>, transform_indices = @transform_0, window_bounds = array<i64: 16, 20>}, {pipeline_mode = #tpu.pipeline_mode<synchronous>, transform_indices = @transform_1, window_bounds = array<i64: 8, 32>}, {pipeline_mode = #tpu.pipeline_mode<synchronous>, transform_indices = @transform_2, window_bounds = array<i64: 16, 32>}, {pipeline_mode = #tpu.pipeline_mode<synchronous>, transform_indices = @transform_3, window_bounds = array<i64: 16, 8>}, {pipeline_mode = #tpu.pipeline_mode<synchronous>, transform_indices = @transform_4, window_bounds = array<i64: 8, 16>}, {pipeline_mode = #tpu.pipeline_mode<synchronous>, transform_indices = @transform_5, window_bounds = array<i64: 20, 32>}, {pipeline_mode = #tpu.pipeline_mode<synchronous>, transform_indices = @transform_6, window_bounds = array<i64: 1, 32>}, {pipeline_mode = #tpu.pipeline_mode<synchronous>, transform_indices = @transform_7, window_bounds = array<i64: 32, 64>}, {pipeline_mode = #tpu.pipeline_mode<synchronous>, transform_indices = @transform_8, window_bounds = array<i64: 32, 64>}, {pipeline_mode = #tpu.pipeline_mode<synchronous>, transform_indices = @transform_9, window_bounds = array<i64: 1, 32>}, {pipeline_mode = #tpu.pipeline_mode<synchronous>, transform_indices = @transform_10, window_bounds = array<i64: 1, 32>}, {pipeline_mode = #tpu.pipeline_mode<synchronous>, transform_indices = @transform_11, window_bounds = array<i64: 32, 64>}, {pipeline_mode = #tpu.pipeline_mode<synchronous>, transform_indices = @transform_12, window_bounds = array<i64: 32, 64>}, {pipeline_mode = #tpu.pipeline_mode<synchronous>, transform_indices = @transform_13, window_bounds = array<i64: 1, 32>}, {pipeline_mode = #tpu.pipeline_mode<synchronous>, transform_indices = @transform_14, window_bounds = array<i64: 1, 32>}, {pipeline_mode = #tpu.pipeline_mode<synchronous>, transform_indices = @transform_15, window_bounds = array<i64: 1, 128>}]} {
    %c0 = arith.constant 0 : index
    %c0_0 = arith.constant 0 : index
    %0 = vector.load %arg3[%c0, %c0_0] : memref<8x32xf32, #tpu.memory_space<vmem>>, vector<8x32xf32>
    %c0_1 = arith.constant 0 : index
    %c0_2 = arith.constant 0 : index
    %1 = vector.load %arg2[%c0_1, %c0_2] : memref<16x20xf32, #tpu.memory_space<vmem>>, vector<16x20xf32>
    %c0_3 = arith.constant 0 : index
    %c0_4 = arith.constant 0 : index
    %2 = vector.load %arg7[%c0_3, %c0_4] : memref<20x32xf32, #tpu.memory_space<vmem>>, vector<20x32xf32>
    %3 = arith.truncf %1 : vector<16x20xf32> to vector<16x20xbf16>
    %4 = arith.truncf %2 : vector<20x32xf32> to vector<20x32xbf16>
    %cst = arith.constant dense<0.000000e+00> : vector<16x32xf32>
    %5 = tpu.matmul %3, %4, %cst {dimension_numbers = #tpu.dot_dimension_numbers<[1], [0], [0], [1], [0, 0, 1, 1], [], []>} : vector<16x20xbf16>, vector<20x32xbf16>, vector<16x32xf32> -> vector<16x32xf32>
    %c0_5 = arith.constant 0 : index
    %c0_6 = arith.constant 0 : index
    %6 = vector.load %arg8[%c0_5, %c0_6] : memref<1x32xf32, #tpu.memory_space<vmem>>, vector<1x32xf32>
    %7 = vector.broadcast %6 : vector<1x32xf32> to vector<16x32xf32>
    %8 = arith.addf %5, %7 : vector<16x32xf32>
    %c0_7 = arith.constant 0 : index
    %c0_8 = arith.constant 0 : index
    %9 = vector.load %arg4[%c0_7, %c0_8] : memref<16x32xf32, #tpu.memory_space<vmem>>, vector<16x32xf32>
    %10 = arith.addf %8, %9 : vector<16x32xf32>
    %c0_9 = arith.constant 0 : index
    %c0_10 = arith.constant 0 : index
    %11 = vector.load %arg5[%c0_9, %c0_10] : memref<16x8xbf16, #tpu.memory_space<vmem>>, vector<16x8xbf16>
    %c0_11 = arith.constant 0 : index
    %c0_12 = arith.constant 0 : index
    %12 = vector.load %arg6[%c0_11, %c0_12] : memref<8x16xbf16, #tpu.memory_space<vmem>>, vector<8x16xbf16>
    %c0_13 = arith.constant 0 : index
    %c0_14 = arith.constant 0 : index
    %13 = vector.load %arg9[%c0_13, %c0_14] : memref<32x64xf32, #tpu.memory_space<vmem>>, vector<32x64xf32>
    %14 = arith.truncf %0 : vector<8x32xf32> to vector<8x32xbf16>
    %15 = arith.truncf %13 : vector<32x64xf32> to vector<32x64xbf16>
    %cst_15 = arith.constant dense<0.000000e+00> : vector<8x64xf32>
    %16 = tpu.matmul %14, %15, %cst_15 {dimension_numbers = #tpu.dot_dimension_numbers<[1], [0], [0], [1], [0, 0, 1, 1], [], []>} : vector<8x32xbf16>, vector<32x64xbf16>, vector<8x64xf32> -> vector<8x64xf32>
    %c0_16 = arith.constant 0 : index
    %c0_17 = arith.constant 0 : index
    %17 = vector.load %arg10[%c0_16, %c0_17] : memref<32x64xf32, #tpu.memory_space<vmem>>, vector<32x64xf32>
    %18 = arith.truncf %10 : vector<16x32xf32> to vector<16x32xbf16>
    %19 = arith.truncf %17 : vector<32x64xf32> to vector<32x64xbf16>
    %cst_18 = arith.constant dense<0.000000e+00> : vector<16x64xf32>
    %20 = tpu.matmul %18, %19, %cst_18 {dimension_numbers = #tpu.dot_dimension_numbers<[1], [0], [0], [1], [0, 0, 1, 1], [], []>} : vector<16x32xbf16>, vector<32x64xbf16>, vector<16x64xf32> -> vector<16x64xf32>
    %21 = vector.extract_strided_slice %16 {offsets = [0, 0], sizes = [8, 32], strides = [1, 1]} : vector<8x64xf32> to vector<8x32xf32>
    %22 = arith.truncf %21 : vector<8x32xf32> to vector<8x32xbf16>
    %cst_19 = arith.constant dense<0.000000e+00> : vector<16x32xf32>
    %23 = tpu.matmul %11, %22, %cst_19 {dimension_numbers = #tpu.dot_dimension_numbers<[1], [0], [0], [1], [0, 0, 1, 1], [], []>} : vector<16x8xbf16>, vector<8x32xbf16>, vector<16x32xf32> -> vector<16x32xf32>
    %24 = vector.extract_strided_slice %20 {offsets = [0, 32], sizes = [16, 32], strides = [1, 1]} : vector<16x64xf32> to vector<16x32xf32>
    %25 = arith.addf %23, %24 : vector<16x32xf32>
    %c0_20 = arith.constant 0 : index
    %c0_21 = arith.constant 0 : index
    %26 = vector.load %arg11[%c0_20, %c0_21] : memref<1x32xf32, #tpu.memory_space<vmem>>, vector<1x32xf32>
    %27 = vector.broadcast %26 : vector<1x32xf32> to vector<16x32xf32>
    %28 = arith.addf %25, %27 : vector<16x32xf32>
    %29 = vector.extract_strided_slice %20 {offsets = [0, 0], sizes = [16, 32], strides = [1, 1]} : vector<16x64xf32> to vector<16x32xf32>
    %30 = arith.truncf %29 : vector<16x32xf32> to vector<16x32xbf16>
    %cst_22 = arith.constant dense<0.000000e+00> : vector<8x32xf32>
    %31 = tpu.matmul %12, %30, %cst_22 {dimension_numbers = #tpu.dot_dimension_numbers<[1], [0], [0], [1], [0, 0, 1, 1], [], []>} : vector<8x16xbf16>, vector<16x32xbf16>, vector<8x32xf32> -> vector<8x32xf32>
    %32 = vector.extract_strided_slice %16 {offsets = [0, 32], sizes = [8, 32], strides = [1, 1]} : vector<8x64xf32> to vector<8x32xf32>
    %33 = arith.addf %31, %32 : vector<8x32xf32>
    %c0_23 = arith.constant 0 : index
    %c0_24 = arith.constant 0 : index
    %34 = vector.load %arg12[%c0_23, %c0_24] : memref<1x32xf32, #tpu.memory_space<vmem>>, vector<1x32xf32>
    %35 = vector.broadcast %34 : vector<1x32xf32> to vector<8x32xf32>
    %36 = arith.addf %33, %35 : vector<8x32xf32>
    %cst_25 = arith.constant 0.000000e+00 : f32
    %37 = vector.broadcast %cst_25 : f32 to vector<16x32xf32>
    %38 = arith.maximumf %28, %37 : vector<16x32xf32>
    %cst_26 = arith.constant 0.000000e+00 : f32
    %39 = vector.broadcast %cst_26 : f32 to vector<8x32xf32>
    %40 = arith.maximumf %36, %39 : vector<8x32xf32>
    %c0_27 = arith.constant 0 : index
    %c0_28 = arith.constant 0 : index
    %41 = vector.load %arg13[%c0_27, %c0_28] : memref<32x64xf32, #tpu.memory_space<vmem>>, vector<32x64xf32>
    %42 = arith.truncf %40 : vector<8x32xf32> to vector<8x32xbf16>
    %43 = arith.truncf %41 : vector<32x64xf32> to vector<32x64xbf16>
    %cst_29 = arith.constant dense<0.000000e+00> : vector<8x64xf32>
    %44 = tpu.matmul %42, %43, %cst_29 {dimension_numbers = #tpu.dot_dimension_numbers<[1], [0], [0], [1], [0, 0, 1, 1], [], []>} : vector<8x32xbf16>, vector<32x64xbf16>, vector<8x64xf32> -> vector<8x64xf32>
    %c0_30 = arith.constant 0 : index
    %c0_31 = arith.constant 0 : index
    %45 = vector.load %arg14[%c0_30, %c0_31] : memref<32x64xf32, #tpu.memory_space<vmem>>, vector<32x64xf32>
    %46 = arith.truncf %38 : vector<16x32xf32> to vector<16x32xbf16>
    %47 = arith.truncf %45 : vector<32x64xf32> to vector<32x64xbf16>
    %cst_32 = arith.constant dense<0.000000e+00> : vector<16x64xf32>
    %48 = tpu.matmul %46, %47, %cst_32 {dimension_numbers = #tpu.dot_dimension_numbers<[1], [0], [0], [1], [0, 0, 1, 1], [], []>} : vector<16x32xbf16>, vector<32x64xbf16>, vector<16x64xf32> -> vector<16x64xf32>
    %49 = vector.extract_strided_slice %44 {offsets = [0, 0], sizes = [8, 32], strides = [1, 1]} : vector<8x64xf32> to vector<8x32xf32>
    %50 = arith.truncf %49 : vector<8x32xf32> to vector<8x32xbf16>
    %cst_33 = arith.constant dense<0.000000e+00> : vector<16x32xf32>
    %51 = tpu.matmul %11, %50, %cst_33 {dimension_numbers = #tpu.dot_dimension_numbers<[1], [0], [0], [1], [0, 0, 1, 1], [], []>} : vector<16x8xbf16>, vector<8x32xbf16>, vector<16x32xf32> -> vector<16x32xf32>
    %52 = vector.extract_strided_slice %48 {offsets = [0, 32], sizes = [16, 32], strides = [1, 1]} : vector<16x64xf32> to vector<16x32xf32>
    %53 = arith.addf %51, %52 : vector<16x32xf32>
    %c0_34 = arith.constant 0 : index
    %c0_35 = arith.constant 0 : index
    %54 = vector.load %arg15[%c0_34, %c0_35] : memref<1x32xf32, #tpu.memory_space<vmem>>, vector<1x32xf32>
    %55 = vector.broadcast %54 : vector<1x32xf32> to vector<16x32xf32>
    %56 = arith.addf %53, %55 : vector<16x32xf32>
    %57 = vector.extract_strided_slice %48 {offsets = [0, 0], sizes = [16, 32], strides = [1, 1]} : vector<16x64xf32> to vector<16x32xf32>
    %58 = arith.truncf %57 : vector<16x32xf32> to vector<16x32xbf16>
    %cst_36 = arith.constant dense<0.000000e+00> : vector<8x32xf32>
    %59 = tpu.matmul %12, %58, %cst_36 {dimension_numbers = #tpu.dot_dimension_numbers<[1], [0], [0], [1], [0, 0, 1, 1], [], []>} : vector<8x16xbf16>, vector<16x32xbf16>, vector<8x32xf32> -> vector<8x32xf32>
    %60 = vector.extract_strided_slice %44 {offsets = [0, 32], sizes = [8, 32], strides = [1, 1]} : vector<8x64xf32> to vector<8x32xf32>
    %61 = arith.addf %59, %60 : vector<8x32xf32>
    %c0_37 = arith.constant 0 : index
    %c0_38 = arith.constant 0 : index
    %62 = vector.load %arg16[%c0_37, %c0_38] : memref<1x32xf32, #tpu.memory_space<vmem>>, vector<1x32xf32>
    %63 = vector.broadcast %62 : vector<1x32xf32> to vector<8x32xf32>
    %64 = arith.addf %61, %63 : vector<8x32xf32>
    %c0_39 = arith.constant 0 : index
    %c0_40 = arith.constant 0 : index
    %65 = vector.load %arg18[%c0_39, %c0_40] : memref<8x32xf32, #tpu.memory_space<vmem>>, vector<8x32xf32>
    tpu.vector_store %arg18[%c0_39, %c0_40], %64 {strides = array<i32>} : memref<8x32xf32, #tpu.memory_space<vmem>>, vector<8x32xf32>,
    %c0_41 = arith.constant 0 : index
    %c0_42 = arith.constant 0 : index
    %66 = vector.load %arg19[%c0_41, %c0_42] : memref<16x32xf32, #tpu.memory_space<vmem>>, vector<16x32xf32>
    tpu.vector_store %arg19[%c0_41, %c0_42], %56 {strides = array<i32>} : memref<16x32xf32, #tpu.memory_space<vmem>>, vector<16x32xf32>,
    %cst_43 = arith.constant 0.000000e+00 : f32
    %67 = vector.broadcast %cst_43 : f32 to vector<128x32xf32>
    %c0_44 = arith.constant 0 : index
    %c0_45 = arith.constant 0 : index
    %68 = vector.load %arg20[%c0_44, %c0_45] : memref<128x32xf32, #tpu.memory_space<vmem>>, vector<128x32xf32>
    tpu.vector_store %arg20[%c0_44, %c0_45], %67 {strides = array<i32>} : memref<128x32xf32, #tpu.memory_space<vmem>>, vector<128x32xf32>,
    %cst_46 = arith.constant 0.000000e+00 : f32
    %69 = vector.broadcast %cst_46 : f32 to vector<128x32xf32>
    %c0_47 = arith.constant 0 : index
    %c0_48 = arith.constant 0 : index
    %70 = vector.load %arg21[%c0_47, %c0_48] : memref<128x32xf32, #tpu.memory_space<vmem>>, vector<128x32xf32>
    tpu.vector_store %arg21[%c0_47, %c0_48], %69 {strides = array<i32>} : memref<128x32xf32, #tpu.memory_space<vmem>>, vector<128x32xf32>,
    %c0_i32 = arith.constant 0 : i32
    %c8_i32 = arith.constant 8 : i32
    %71 = arith.addi %c0_i32, %c8_i32 : i32
    %c1_i32 = arith.constant 1 : i32
    scf.for %arg22 = %c0_i32 to %71 step %c1_i32  : i32 {
      %c1_i32_58 = arith.constant 1 : i32
      %78 = arith.muli %arg22, %c1_i32_58 : i32
      %c0_i32_59 = arith.constant 0 : i32
      %79 = arith.addi %c0_i32_59, %78 : i32
      %c0_60 = arith.constant 0 : index
      %80 = arith.index_cast %79 : i32 to index
      %81 = memref.load %arg1[%c0_60, %80] : memref<2x128xi32, #tpu.memory_space<smem>>
      %c1 = arith.constant 1 : index
      %82 = arith.index_cast %79 : i32 to index
      %83 = memref.load %arg1[%c1, %82] : memref<2x128xi32, #tpu.memory_space<smem>>
      %84 = arith.index_cast %81 : i32 to index
      %c0_61 = arith.constant 0 : index
      %85 = vector.load %arg18[%84, %c0_61] : memref<8x32xf32, #tpu.memory_space<vmem>>, vector<1x32xf32>
      %86 = arith.index_cast %79 : i32 to index
      %c0_62 = arith.constant 0 : index
      %87 = vector.load %arg20[%86, %c0_62] : memref<128x32xf32, #tpu.memory_space<vmem>>, vector<1x32xf32>
      tpu.vector_store %arg20[%86, %c0_62], %85 {strides = array<i32>} : memref<128x32xf32, #tpu.memory_space<vmem>>, vector<1x32xf32>,
      %88 = arith.index_cast %83 : i32 to index
      %c0_63 = arith.constant 0 : index
      %89 = vector.load %arg19[%88, %c0_63] : memref<16x32xf32, #tpu.memory_space<vmem>>, vector<1x32xf32>
      %90 = arith.index_cast %79 : i32 to index
      %c0_64 = arith.constant 0 : index
      %91 = vector.load %arg21[%90, %c0_64] : memref<128x32xf32, #tpu.memory_space<vmem>>, vector<1x32xf32>
      tpu.vector_store %arg21[%90, %c0_64], %89 {strides = array<i32>} : memref<128x32xf32, #tpu.memory_space<vmem>>, vector<1x32xf32>,
    }
    %c8_i32_49 = arith.constant 8 : i32
    %c0_50 = arith.constant 0 : index
    %c0_51 = arith.constant 0 : index
    %72 = vector.load %arg20[%c0_50, %c0_51] : memref<128x32xf32, #tpu.memory_space<vmem>>, vector<128x32xf32>
    %c0_52 = arith.constant 0 : index
    %c0_53 = arith.constant 0 : index
    %73 = vector.load %arg21[%c0_52, %c0_53] : memref<128x32xf32, #tpu.memory_space<vmem>>, vector<128x32xf32>
    %74 = arith.mulf %72, %73 : vector<128x32xf32>
    %cst_54 = arith.constant 1.000000e+00 : f32
    %75 = vector.broadcast %cst_54 : f32 to vector<1x32xf32>
    %cst_55 = arith.constant dense<0.000000e+00> : vector<1x128xf32>
    %76 = tpu.matmul %75, %74, %cst_55 {dimension_numbers = #tpu.dot_dimension_numbers<[1], [1], [0], [0], [0, 0, 1, 0], [], []>} : vector<1x32xf32>, vector<128x32xf32>, vector<1x128xf32> -> vector<1x128xf32>
    %c0_56 = arith.constant 0 : index
    %c0_57 = arith.constant 0 : index
    %77 = vector.load %arg17[%c0_56, %c0_57] : memref<1x128xf32, #tpu.memory_space<vmem>>, vector<1x128xf32>
    tpu.vector_store %arg17[%c0_56, %c0_57], %76 {strides = array<i32>} : memref<1x128xf32, #tpu.memory_space<vmem>>, vector<1x128xf32>,
    return
  }
  func.func @transform_0(%arg0: i32, %arg1: memref<2x128xi32, #tpu.memory_space<smem>>) -> (i32, i32) {
    %c0_i32 = arith.constant 0 : i32
    %c0_i32_0 = arith.constant 0 : i32
    %c0_i32_1 = arith.constant 0 : i32
    return %c0_i32, %c0_i32_0 : i32, i32
  }
  func.func @transform_1(%arg0: i32, %arg1: memref<2x128xi32, #tpu.memory_space<smem>>) -> (i32, i32) {
    %c0_i32 = arith.constant 0 : i32
    %c0_i32_0 = arith.constant 0 : i32
    %c0_i32_1 = arith.constant 0 : i32
    return %c0_i32, %c0_i32_0 : i32, i32
  }
  func.func @transform_2(%arg0: i32, %arg1: memref<2x128xi32, #tpu.memory_space<smem>>) -> (i32, i32) {
    %c0_i32 = arith.constant 0 : i32
    %c0_i32_0 = arith.constant 0 : i32
    %c0_i32_1 = arith.constant 0 : i32
    return %c0_i32, %c0_i32_0 : i32, i32
  }
  func.func @transform_3(%arg0: i32, %arg1: memref<2x128xi32, #tpu.memory_space<smem>>) -> (i32, i32) {
    %c0_i32 = arith.constant 0 : i32
    %c0_i32_0 = arith.constant 0 : i32
    %c0_i32_1 = arith.constant 0 : i32
    return %c0_i32, %c0_i32_0 : i32, i32
  }
  func.func @transform_4(%arg0: i32, %arg1: memref<2x128xi32, #tpu.memory_space<smem>>) -> (i32, i32) {
    %c0_i32 = arith.constant 0 : i32
    %c0_i32_0 = arith.constant 0 : i32
    %c0_i32_1 = arith.constant 0 : i32
    return %c0_i32, %c0_i32_0 : i32, i32
  }
  func.func @transform_5(%arg0: i32, %arg1: memref<2x128xi32, #tpu.memory_space<smem>>) -> (i32, i32) {
    %c0_i32 = arith.constant 0 : i32
    %c0_i32_0 = arith.constant 0 : i32
    %c0_i32_1 = arith.constant 0 : i32
    return %c0_i32, %c0_i32_0 : i32, i32
  }
  func.func @transform_6(%arg0: i32, %arg1: memref<2x128xi32, #tpu.memory_space<smem>>) -> (i32, i32) {
    %c0_i32 = arith.constant 0 : i32
    %c0_i32_0 = arith.constant 0 : i32
    %c0_i32_1 = arith.constant 0 : i32
    return %c0_i32, %c0_i32_0 : i32, i32
  }
  func.func @transform_7(%arg0: i32, %arg1: memref<2x128xi32, #tpu.memory_space<smem>>) -> (i32, i32) {
    %c0_i32 = arith.constant 0 : i32
    %c0_i32_0 = arith.constant 0 : i32
    %c0_i32_1 = arith.constant 0 : i32
    return %c0_i32, %c0_i32_0 : i32, i32
  }
  func.func @transform_8(%arg0: i32, %arg1: memref<2x128xi32, #tpu.memory_space<smem>>) -> (i32, i32) {
    %c0_i32 = arith.constant 0 : i32
    %c0_i32_0 = arith.constant 0 : i32
    %c0_i32_1 = arith.constant 0 : i32
    return %c0_i32, %c0_i32_0 : i32, i32
  }
  func.func @transform_9(%arg0: i32, %arg1: memref<2x128xi32, #tpu.memory_space<smem>>) -> (i32, i32) {
    %c0_i32 = arith.constant 0 : i32
    %c0_i32_0 = arith.constant 0 : i32
    %c0_i32_1 = arith.constant 0 : i32
    return %c0_i32, %c0_i32_0 : i32, i32
  }
  func.func @transform_10(%arg0: i32, %arg1: memref<2x128xi32, #tpu.memory_space<smem>>) -> (i32, i32) {
    %c0_i32 = arith.constant 0 : i32
    %c0_i32_0 = arith.constant 0 : i32
    %c0_i32_1 = arith.constant 0 : i32
    return %c0_i32, %c0_i32_0 : i32, i32
  }
  func.func @transform_11(%arg0: i32, %arg1: memref<2x128xi32, #tpu.memory_space<smem>>) -> (i32, i32) {
    %c0_i32 = arith.constant 0 : i32
    %c0_i32_0 = arith.constant 0 : i32
    %c0_i32_1 = arith.constant 0 : i32
    return %c0_i32, %c0_i32_0 : i32, i32
  }
  func.func @transform_12(%arg0: i32, %arg1: memref<2x128xi32, #tpu.memory_space<smem>>) -> (i32, i32) {
    %c0_i32 = arith.constant 0 : i32
    %c0_i32_0 = arith.constant 0 : i32
    %c0_i32_1 = arith.constant 0 : i32
    return %c0_i32, %c0_i32_0 : i32, i32
  }
  func.func @transform_13(%arg0: i32, %arg1: memref<2x128xi32, #tpu.memory_space<smem>>) -> (i32, i32) {
    %c0_i32 = arith.constant 0 : i32
    %c0_i32_0 = arith.constant 0 : i32
    %c0_i32_1 = arith.constant 0 : i32
    return %c0_i32, %c0_i32_0 : i32, i32
  }
  func.func @transform_14(%arg0: i32, %arg1: memref<2x128xi32, #tpu.memory_space<smem>>) -> (i32, i32) {
    %c0_i32 = arith.constant 0 : i32
    %c0_i32_0 = arith.constant 0 : i32
    %c0_i32_1 = arith.constant 0 : i32
    return %c0_i32, %c0_i32_0 : i32, i32
  }
  func.func @transform_15(%arg0: i32, %arg1: memref<2x128xi32, #tpu.memory_space<smem>>) -> (i32, i32) {
    %c0_i32 = arith.constant 0 : i32
    %c0_i32_0 = arith.constant 0 : i32
    %c0_i32_1 = arith.constant 0 : i32
    return %c0_i32, %c0_i32_0 : i32, i32
  }
}

</mosaic_0001>

<llo_original>
// kernel: tpu_custom_call.1
$region0: #{tpu_custom_call.1}
  #allocation0 [shape = 'u32[]', space=smem, size = 0x4, offset = 0x4, fixed_abs, tag = 'smem constant byte address 0x4 - core index']
  #allocation1 [shape = 'u32[144,128]{1,0:T(1,128)}', space=vmem, size = 0x12000, scoped, tag = 'internal scratch']
  #allocation2 [shape = 'f32[8,32]{1,0:T(8,128)}', space=vmem, size = 0x1000, scoped, tag = 'scratch operand']
  #allocation3 [shape = 'f32[16,32]{1,0:T(8,128)}', space=vmem, size = 0x2000, scoped, tag = 'scratch operand']
  #allocation4 [shape = 'f32[128,32]{1,0:T(8,128)}', space=vmem, size = 0x10000, scoped, tag = 'scratch operand']
  #allocation5 [shape = 'f32[128,32]{1,0:T(8,128)}', space=vmem, size = 0x10000, scoped, tag = 'scratch operand']
  #allocation6 [shape = 's32[1]{0}', space=sflag, size = 0x4, scoped, tag = 'scoped memory for tpu_custom_call.1']
  #allocation7 [shape = 'u8[1024]{0}', space=smem, size = 0x400, scoped, tag = 'prefetched SMEM operand 0']
  %s0 = inlined_call_operand.hbm [shape: s32[2,128], index: 0, kind: input, shape index: {}]
  %s1 = inlined_call_operand.hbm [shape: f32[16,20], index: 1, kind: input, shape index: {}]
  %s2 = inlined_call_operand.hbm [shape: f32[8,32], index: 2, kind: input, shape index: {}]
  %s3 = inlined_call_operand.hbm [shape: f32[16,32], index: 3, kind: input, shape index: {}]
  %s4 = inlined_call_operand.vmem [shape: bf16[16,8], index: 4, kind: input, shape index: {}]
  %s5 = inlined_call_operand.hbm [shape: bf16[8,16], index: 5, kind: input, shape index: {}]
  %s6 = inlined_call_operand.hbm [shape: f32[20,32], index: 6, kind: input, shape index: {}]
  %s7 = inlined_call_operand.vmem [shape: f32[1,32], index: 7, kind: input, shape index: {}]
  %s8 = inlined_call_operand.hbm [shape: f32[32,64], index: 8, kind: input, shape index: {}]
  %s9 = inlined_call_operand.hbm [shape: f32[32,64], index: 9, kind: input, shape index: {}]
  %s10 = inlined_call_operand.hbm [shape: f32[1,32], index: 10, kind: input, shape index: {}]
  %s11 = inlined_call_operand.hbm [shape: f32[1,32], index: 11, kind: input, shape index: {}]
  %s12 = inlined_call_operand.vmem [shape: f32[32,64], index: 12, kind: input, shape index: {}]
  %s13 = inlined_call_operand.hbm [shape: f32[32,64], index: 13, kind: input, shape index: {}]
  %s14 = inlined_call_operand.vmem [shape: f32[1,32], index: 14, kind: input, shape index: {}]
  %s15 = inlined_call_operand.vmem [shape: f32[1,32], index: 15, kind: input, shape index: {}]
  %s16 = inlined_call_operand.hbm [shape: f32[1,128], index: 16, kind: output, shape index: {}]
  %s17 = sld [smem:[#allocation0]]
  $region117: #{tpu_custom_call.1} parent=0
    _
  %s19 = ssub.s32 1, %s17
  %s20 = scalar_select 0, %s19, %s17
  %22 = dma.hbm_to_smem %s0, 32, [#allocation7], [#allocation6]
  %23 = dma.done [#allocation6], 32
  %24 = sfence
  $region1: #{tpu_custom_call.1} parent=0
    #allocation8 [shape = 'u8[8192]{0}', space=vmem, size = 0x2000, scoped, tag = 'input window, operand 1, single buffered']
    #allocation9 [shape = 's32[1]{0}', space=sflag, size = 0x4, scoped, tag = 'scoped memory for tpu_custom_call.1']
    #allocation10 [shape = 's32[1]{0}', space=sflag, size = 0x4, scoped, tag = 'scoped memory for tpu_custom_call.1']
    #allocation11 [shape = 'u8[4096]{0}', space=vmem, size = 0x1000, scoped, tag = 'input window, operand 2, single buffered']
    #allocation12 [shape = 's32[1]{0}', space=sflag, size = 0x4, scoped, tag = 'scoped memory for tpu_custom_call.1']
    #allocation13 [shape = 'u8[8192]{0}', space=vmem, size = 0x2000, scoped, tag = 'input window, operand 3, single buffered']
    #allocation14 [shape = 'u8[2048]{0}', space=vmem, size = 0x800, scoped, tag = 'input window, operand 5, single buffered']
    #allocation15 [shape = 's32[1]{0}', space=sflag, size = 0x4, scoped, tag = 'scoped memory for tpu_custom_call.1']
    #allocation16 [shape = 'u8[12288]{0}', space=vmem, size = 0x3000, scoped, tag = 'input window, operand 6, single buffered']
    #allocation17 [shape = 'u8[16384]{0}', space=vmem, size = 0x4000, scoped, tag = 'input window, operand 8, single buffered']
    #allocation18 [shape = 's32[1]{0}', space=sflag, size = 0x4, scoped, tag = 'scoped memory for tpu_custom_call.1']
    #allocation19 [shape = 'u8[16384]{0}', space=vmem, size = 0x4000, scoped, tag = 'input window, operand 9, single buffered']
    #allocation20 [shape = 'u8[512]{0}', space=vmem, size = 0x400, scoped, tag = 'input window, operand 10, single buffered']
    #allocation21 [shape = 's32[1]{0}', space=sflag, size = 0x4, scoped, tag = 'scoped memory for tpu_custom_call.1']
    #allocation22 [shape = 'u8[512]{0}', space=vmem, size = 0x400, scoped, tag = 'input window, operand 11, single buffered']
    #allocation23 [shape = 'u8[16384]{0}', space=vmem, size = 0x4000, scoped, tag = 'input window, operand 13, single buffered']
    #allocation24 [shape = 's32[1]{0}', space=sflag, size = 0x4, scoped, tag = 'scoped memory for tpu_custom_call.1']
    #allocation25 [shape = 'u8[512]{0}', space=vmem, size = 0x400, scoped, tag = 'output window, operand 0, single buffered']
    %25 = vsyncpa [#allocation9], 0
    %26 = vsyncpa [#allocation12], 0
    %27 = vsyncpa [#allocation15], 0
    %28 = vsyncpa [#allocation18], 0
    %29 = vsyncpa [#allocation21], 0
    %30 = vsyncpa [#allocation24], 0
    %31 = vsyncpa [#allocation10], 0
    // Predicated region
    $region2: #{tpu_custom_call.1} parent=1 // pred_check
      _
    $region3: #{tpu_custom_call.1} parent=1 // pred_check_branch
      %33 = sbr.rel (0) target = $region5
    $region4: #{tpu_custom_call.1} parent=1 // pred_region
      %s35 = ssub.s32 256, 256
      %36 = vsyncadd [#allocation9], %s35
      %s37 = sshll.u32 [#allocation8], 4
      %s38 = int_to_ptr.vmem [resolvable:$true] %s37
      %43 = dma.hbm_to_vmem [thread:$0]  %s1, 256, %s38, [#allocation9], 128, 128, 8
    $region5: #{tpu_custom_call.1} parent=1 // pred_fallthru
      _
    // Predicated region
    $region6: #{tpu_custom_call.1} parent=1 // pred_check
      _
    $region7: #{tpu_custom_call.1} parent=1 // pred_check_branch
      %45 = sbr.rel (0) target = $region9
    $region8: #{tpu_custom_call.1} parent=1 // pred_region
      %s47 = ssub.s32 128, 128
      %48 = vsyncadd [#allocation12], %s47
      %s50 = sshll.u32 [#allocation11], 4
      %s51 = int_to_ptr.vmem [resolvable:$true] %s50
      %53 = dma.hbm_to_vmem [thread:$0]  %s2, 128, %s51, [#allocation12]
    $region9: #{tpu_custom_call.1} parent=1 // pred_fallthru
      _
    // Predicated region
    $region10: #{tpu_custom_call.1} parent=1 // pred_check
      _
    $region11: #{tpu_custom_call.1} parent=1 // pred_check_branch
      %55 = sbr.rel (0) target = $region13
    $region12: #{tpu_custom_call.1} parent=1 // pred_region
      %s57 = ssub.s32 256, 256
      %58 = vsyncadd [#allocation12], %s57
      %s59 = sshll.u32 [#allocation13], 4
      %s60 = int_to_ptr.vmem [resolvable:$true] %s59
      %65 = dma.hbm_to_vmem [thread:$0]  %s3, 256, %s60, [#allocation12], 128, 128, 8
    $region13: #{tpu_custom_call.1} parent=1 // pred_fallthru
      _
    // Predicated region
    $region14: #{tpu_custom_call.1} parent=1 // pred_check
      _
    $region15: #{tpu_custom_call.1} parent=1 // pred_check_branch
      %67 = sbr.rel (0) target = $region17
    $region16: #{tpu_custom_call.1} parent=1 // pred_region
      _
    $region17: #{tpu_custom_call.1} parent=1 // pred_fallthru
      _
    // Predicated region
    $region18: #{tpu_custom_call.1} parent=1 // pred_check
      _
    $region19: #{tpu_custom_call.1} parent=1 // pred_check_branch
      %69 = sbr.rel (0) target = $region21
    $region20: #{tpu_custom_call.1} parent=1 // pred_region
      %s71 = ssub.s32 64, 64
      %72 = vsyncadd [#allocation15], %s71
      %s74 = sshll.u32 [#allocation14], 4
      %s75 = int_to_ptr.vmem [resolvable:$true] %s74
      %77 = dma.hbm_to_vmem [thread:$0]  %s5, 64, %s75, [#allocation15]
    $region21: #{tpu_custom_call.1} parent=1 // pred_fallthru
      _
    // Predicated region
    $region22: #{tpu_custom_call.1} parent=1 // pred_check
      _
    $region23: #{tpu_custom_call.1} parent=1 // pred_check_branch
      %79 = sbr.rel (0) target = $region25
    $region24: #{tpu_custom_call.1} parent=1 // pred_region
      %s81 = ssub.s32 384, 384
      %82 = vsyncadd [#allocation15], %s81
      %s83 = sshll.u32 [#allocation16], 4
      %s84 = int_to_ptr.vmem [resolvable:$true] %s83
      %89 = dma.hbm_to_vmem [thread:$0]  %s6, 384, %s84, [#allocation15], 128, 128, 8
    $region25: #{tpu_custom_call.1} parent=1 // pred_fallthru
      _
    // Predicated region
    $region26: #{tpu_custom_call.1} parent=1 // pred_check
      _
    $region27: #{tpu_custom_call.1} parent=1 // pred_check_branch
      %91 = sbr.rel (0) target = $region29
    $region28: #{tpu_custom_call.1} parent=1 // pred_region
      _
    $region29: #{tpu_custom_call.1} parent=1 // pred_fallthru
      _
    // Predicated region
    $region30: #{tpu_custom_call.1} parent=1 // pred_check
      _
    $region31: #{tpu_custom_call.1} parent=1 // pred_check_branch
      %93 = sbr.rel (0) target = $region33
    $region32: #{tpu_custom_call.1} parent=1 // pred_region
      %s95 = ssub.s32 512, 512
      %96 = vsyncadd [#allocation18], %s95
      %s97 = sshll.u32 [#allocation17], 4
      %s98 = int_to_ptr.vmem [resolvable:$true] %s97
      %103 = dma.hbm_to_vmem [thread:$0]  %s8, 512, %s98, [#allocation18], 128, 128, 8
    $region33: #{tpu_custom_call.1} parent=1 // pred_fallthru
      _
    // Predicated region
    $region34: #{tpu_custom_call.1} parent=1 // pred_check
      _
    $region35: #{tpu_custom_call.1} parent=1 // pred_check_branch
      %105 = sbr.rel (0) target = $region37
    $region36: #{tpu_custom_call.1} parent=1 // pred_region
      %s107 = ssub.s32 512, 512
      %108 = vsyncadd [#allocation18], %s107
      %s109 = sshll.u32 [#allocation19], 4
      %s110 = int_to_ptr.vmem [resolvable:$true] %s109
      %115 = dma.hbm_to_vmem [thread:$0]  %s9, 512, %s110, [#allocation18], 128, 128, 8
    $region37: #{tpu_custom_call.1} parent=1 // pred_fallthru
      _
    // Predicated region
    $region38: #{tpu_custom_call.1} parent=1 // pred_check
      _
    $region39: #{tpu_custom_call.1} parent=1 // pred_check_branch
      %117 = sbr.rel (0) target = $region41
    $region40: #{tpu_custom_call.1} parent=1 // pred_region
      %s119 = ssub.s32 16, 16
      %120 = vsyncadd [#allocation21], %s119
      %s122 = sshll.u32 [#allocation20], 4
      %s123 = int_to_ptr.vmem [resolvable:$true] %s122
      %125 = dma.hbm_to_vmem [thread:$0]  %s10, 16, %s123, [#allocation21]
    $region41: #{tpu_custom_call.1} parent=1 // pred_fallthru
      _
    // Predicated region
    $region42: #{tpu_custom_call.1} parent=1 // pred_check
      _
    $region43: #{tpu_custom_call.1} parent=1 // pred_check_branch
      %127 = sbr.rel (0) target = $region45
    $region44: #{tpu_custom_call.1} parent=1 // pred_region
      %s129 = ssub.s32 16, 16
      %130 = vsyncadd [#allocation21], %s129
      %s132 = sshll.u32 [#allocation22], 4
      %s133 = int_to_ptr.vmem [resolvable:$true] %s132
      %135 = dma.hbm_to_vmem [thread:$0]  %s11, 16, %s133, [#allocation21]
    $region45: #{tpu_custom_call.1} parent=1 // pred_fallthru
      _
    // Predicated region
    $region46: #{tpu_custom_call.1} parent=1 // pred_check
      _
    $region47: #{tpu_custom_call.1} parent=1 // pred_check_branch
      %137 = sbr.rel (0) target = $region49
    $region48: #{tpu_custom_call.1} parent=1 // pred_region
      _
    $region49: #{tpu_custom_call.1} parent=1 // pred_fallthru
      _
    // Predicated region
    $region50: #{tpu_custom_call.1} parent=1 // pred_check
      _
    $region51: #{tpu_custom_call.1} parent=1 // pred_check_branch
      %139 = sbr.rel (0) target = $region53
    $region52: #{tpu_custom_call.1} parent=1 // pred_region
      %s141 = ssub.s32 512, 512
      %142 = vsyncadd [#allocation24], %s141
      %s143 = sshll.u32 [#allocation23], 4
      %s144 = int_to_ptr.vmem [resolvable:$true] %s143
      %149 = dma.hbm_to_vmem [thread:$0]  %s13, 512, %s144, [#allocation24], 128, 128, 8
    $region53: #{tpu_custom_call.1} parent=1 // pred_fallthru
      _
    // Predicated region
    $region54: #{tpu_custom_call.1} parent=1 // pred_check
      _
    $region55: #{tpu_custom_call.1} parent=1 // pred_check_branch
      %151 = sbr.rel (0) target = $region57
    $region56: #{tpu_custom_call.1} parent=1 // pred_region
      _
    $region57: #{tpu_custom_call.1} parent=1 // pred_fallthru
      _
    // Predicated region
    $region58: #{tpu_custom_call.1} parent=1 // pred_check
      _
    $region59: #{tpu_custom_call.1} parent=1 // pred_check_branch
      %153 = sbr.rel (0) target = $region61
    $region60: #{tpu_custom_call.1} parent=1 // pred_region
      _
    $region61: #{tpu_custom_call.1} parent=1 // pred_fallthru
      _
    // Predicated region
    $region62: #{tpu_custom_call.1} parent=1 // pred_check
      _
    $region63: #{tpu_custom_call.1} parent=1 // pred_check_branch
      %155 = sbr.rel (0) target = $region65
    $region64: #{tpu_custom_call.1} parent=1 // pred_region
      %156 = dma.done [#allocation9], 256
    $region65: #{tpu_custom_call.1} parent=1 // pred_fallthru
      _
    // Predicated region
    $region66: #{tpu_custom_call.1} parent=1 // pred_check
      _
    $region67: #{tpu_custom_call.1} parent=1 // pred_check_branch
      %158 = sbr.rel (0) target = $region69
    $region68: #{tpu_custom_call.1} parent=1 // pred_region
      %159 = dma.done [#allocation12], 128
    $region69: #{tpu_custom_call.1} parent=1 // pred_fallthru
      _
    // Predicated region
    $region70: #{tpu_custom_call.1} parent=1 // pred_check
      _
    $region71: #{tpu_custom_call.1} parent=1 // pred_check_branch
      %161 = sbr.rel (0) target = $region73
    $region72: #{tpu_custom_call.1} parent=1 // pred_region
      %162 = dma.done [#allocation12], 256
    $region73: #{tpu_custom_call.1} parent=1 // pred_fallthru
      _
    // Predicated region
    $region74: #{tpu_custom_call.1} parent=1 // pred_check
      _
    $region75: #{tpu_custom_call.1} parent=1 // pred_check_branch
      %164 = sbr.rel (0) target = $region77
    $region76: #{tpu_custom_call.1} parent=1 // pred_region
      %165 = dma.done [#allocation15], 64
    $region77: #{tpu_custom_call.1} parent=1 // pred_fallthru
      _
    // Predicated region
    $region78: #{tpu_custom_call.1} parent=1 // pred_check
      _
    $region79: #{tpu_custom_call.1} parent=1 // pred_check_branch
      %167 = sbr.rel (0) target = $region81
    $region80: #{tpu_custom_call.1} parent=1 // pred_region
      %168 = dma.done [#allocation15], 384
    $region81: #{tpu_custom_call.1} parent=1 // pred_fallthru
      _
    // Predicated region
    $region82: #{tpu_custom_call.1} parent=1 // pred_check
      _
    $region83: #{tpu_custom_call.1} parent=1 // pred_check_branch
      %170 = sbr.rel (0) target = $region85
    $region84: #{tpu_custom_call.1} parent=1 // pred_region
      %171 = dma.done [#allocation18], 512
    $region85: #{tpu_custom_call.1} parent=1 // pred_fallthru
      _
    // Predicated region
    $region86: #{tpu_custom_call.1} parent=1 // pred_check
      _
    $region87: #{tpu_custom_call.1} parent=1 // pred_check_branch
      %173 = sbr.rel (0) target = $region89
    $region88: #{tpu_custom_call.1} parent=1 // pred_region
      %174 = dma.done [#allocation18], 512
    $region89: #{tpu_custom_call.1} parent=1 // pred_fallthru
      _
    // Predicated region
    $region90: #{tpu_custom_call.1} parent=1 // pred_check
      _
    $region91: #{tpu_custom_call.1} parent=1 // pred_check_branch
      %176 = sbr.rel (0) target = $region93
    $region92: #{tpu_custom_call.1} parent=1 // pred_region
      %177 = dma.done [#allocation21], 16
    $region93: #{tpu_custom_call.1} parent=1 // pred_fallthru
      _
    // Predicated region
    $region94: #{tpu_custom_call.1} parent=1 // pred_check
      _
    $region95: #{tpu_custom_call.1} parent=1 // pred_check_branch
      %179 = sbr.rel (0) target = $region97
    $region96: #{tpu_custom_call.1} parent=1 // pred_region
      %180 = dma.done [#allocation21], 16
    $region97: #{tpu_custom_call.1} parent=1 // pred_fallthru
      _
    // Predicated region
    $region98: #{tpu_custom_call.1} parent=1 // pred_check
      _
    $region99: #{tpu_custom_call.1} parent=1 // pred_check_branch
      %182 = sbr.rel (0) target = $region101
    $region100: #{tpu_custom_call.1} parent=1 // pred_region
      %183 = dma.done [#allocation24], 512
    $region101: #{tpu_custom_call.1} parent=1 // pred_fallthru
      _
    %v185 = vld [vmem:[#allocation11] sm:$0xff]
    %v186 = vld [vmem:[#allocation8] sm:$0xff]
    %v187 = vld [vmem:[#allocation8 + $0x8] sm:$0xff]
    %v188 = vld [vmem:[#allocation16] sm:$0xff]
    %v189 = vld [vmem:[#allocation16 + $0x8] sm:$0xff]
    %v190 = vld [vmem:[#allocation16 + $0x10] sm:$0xf]
    %v191 = vpack.c.bf16 %v187, %v186
    %v192 = vpack.c.bf16 %v189, %v188
    %v193 = vpack.c.bf16 %v190, %v190
    %v194 = vld [vmem:[%s7] sm:$0x1]
    %v196 = vlaneseq
    %v197 = vshrl.u32 %v196, 7
    %v198 = vsub.s32 0, %v197
    %v199 = vrot.slane %v194, %v198
    %vm201 = vcmask 162816
    %v203 = vsel %vm201, %v191, 0
    %vm205 = vcmask 1041408
    %v207 = vsel %vm205, %v193, 0
    %209 = vmatprep.subr.bf16.mxu0 0
    %210 = vmatpush1.bf16.msra.mxu0 0
    %211 = vmatprep.subr.bf16.mxu0 0
    %212 = vmatpush1.bf16.msra.mxu0 0
    %213 = vmatprep.subr.bf16.mxu0 0
    %214 = vmatpush1.bf16.msra.mxu0 0
    %215 = vmatprep.subr.bf16.mxu0 0
    %216 = vmatpush1.bf16.msra.mxu0 0
    %217 = vmatprep.subr.bf16.mxu0 0
    %218 = vmatpush1.bf16.msra.mxu0 0
    %219 = vmatprep.subr.bf16.mxu0 0
    %220 = vmatpush1.bf16.msra.mxu0 0
    %221 = vmatprep.subr.bf16.mxu0 0
    %222 = vmatpush1.bf16.msra.mxu0 %v207
    %223 = vmatprep.subr.bf16.mxu0 0
    %224 = vmatpush1.bf16.msra.mxu0 %v192
    %225 = vmatprep.subr.bf16.mxu0 0
    %226 = vmatpush2.bf16.msra.mxu0 0
    %227 = vmatprep.subr.bf16.mxu0 0
    %228 = vmatpush2.bf16.msra.mxu0 0
    %229 = vmatprep.subr.bf16.mxu0 0
    %230 = vmatpush2.bf16.msra.mxu0 0
    %231 = vmatprep.subr.bf16.mxu0 0
    %232 = vmatpush2.bf16.msra.mxu0 0
    %233 = vmatprep.subr.bf16.mxu0 0
    %234 = vmatpush2.bf16.msra.mxu0 0
    %235 = vmatprep.subr.bf16.mxu0 0
    %236 = vmatpush2.bf16.msra.mxu0 0
    %237 = vmatprep.subr.bf16.mxu0 0
    %238 = vmatpush2.bf16.msra.mxu0 0
    %239 = vmatprep.subr.bf16.mxu0 0
    %240 = vmatpush2.bf16.msra.mxu0 0
    %241 = vmatprep.mubr.bf16.mxu0 0
    %242 = vmatmul.mubr.bf16.gmra.mxu0 %v203
    %v243 = vpop.f32.mrf.mxu0
    %v244 = vadd.f32 %v199, %v243
    %v245 = vpop.f32.mrf.mxu0
    %v246 = vpop.f32.mrf.mxu0
    %v247 = vadd.f32 %v199, %v246
    %v248 = vpop.f32.mrf.mxu0
    %249 = vdwg.mxu0
    %v250 = vld [vmem:[#allocation13] sm:$0xff]
    %v251 = vld [vmem:[#allocation13 + $0x8] sm:$0xff]
    %v252 = vadd.f32 %v244, %v250
    %v253 = vadd.f32 %v247, %v251
    %v254 = vld [vmem:[%s4] sm:$0xf]
    %v255 = vld [vmem:[%s4 + $0x4] sm:$0xf]
    %v256 = vld [vmem:[#allocation14] sm:$0xf]
    %v257 = vld [vmem:[#allocation17] sm:$0xff]
    %v258 = vld [vmem:[#allocation17 + $0x8] sm:$0xff]
    %v259 = vld [vmem:[#allocation17 + $0x10] sm:$0xff]
    %v260 = vld [vmem:[#allocation17 + $0x18] sm:$0xff]
    %v261 = vpack.c.bf16 %v185, %v185
    %v262 = vpack.c.bf16 %v258, %v257
    %v263 = vpack.c.bf16 %v260, %v259
    %vm264 = vcmask 261120
    %v266 = vsel %vm264, %v261, 0
    %268 = vmatprep.subr.bf16.mxu0 0
    %269 = vmatpush1.bf16.msra.mxu0 0
    %270 = vmatprep.subr.bf16.mxu0 0
    %271 = vmatpush1.bf16.msra.mxu0 0
    %272 = vmatprep.subr.bf16.mxu0 0
    %273 = vmatpush1.bf16.msra.mxu0 0
    %274 = vmatprep.subr.bf16.mxu0 0
    %275 = vmatpush1.bf16.msra.mxu0 0
    %276 = vmatprep.subr.bf16.mxu0 0
    %277 = vmatpush1.bf16.msra.mxu0 0
    %278 = vmatprep.subr.bf16.mxu0 0
    %279 = vmatpush1.bf16.msra.mxu0 0
    %280 = vmatprep.subr.bf16.mxu0 0
    %281 = vmatpush1.bf16.msra.mxu0 %v263
    %282 = vmatprep.subr.bf16.mxu0 0
    %283 = vmatpush1.bf16.msra.mxu0 %v262
    %284 = vmatprep.subr.bf16.mxu0 0
    %285 = vmatpush2.bf16.msra.mxu0 0
    %286 = vmatprep.subr.bf16.mxu0 0
    %287 = vmatpush2.bf16.msra.mxu0 0
    %288 = vmatprep.subr.bf16.mxu0 0
    %289 = vmatpush2.bf16.msra.mxu0 0
    %290 = vmatprep.subr.bf16.mxu0 0
    %291 = vmatpush2.bf16.msra.mxu0 0
    %292 = vmatprep.subr.bf16.mxu0 0
    %293 = vmatpush2.bf16.msra.mxu0 0
    %294 = vmatprep.subr.bf16.mxu0 0
    %295 = vmatpush2.bf16.msra.mxu0 0
    %296 = vmatprep.subr.bf16.mxu0 0
    %297 = vmatpush2.bf16.msra.mxu0 0
    %298 = vmatprep.subr.bf16.mxu0 0
    %299 = vmatpush2.bf16.msra.mxu0 0
    %300 = vmatprep.mubr.bf16.mxu0 0
    %301 = vmatmul.mubr.bf16.gmra.mxu0 %v266
    %v302 = vpop.f32.mrf.mxu0
    %v303 = vadd.f32 0.0, %v302
    %v304 = vpop.f32.mrf.mxu0
    %v305 = vpop.f32.mrf.mxu0
    %v306 = vpop.f32.mrf.mxu0
    %307 = vdwg.mxu0
    %v308 = vld [vmem:[#allocation19] sm:$0xff]
    %v309 = vld [vmem:[#allocation19 + $0x8] sm:$0xff]
    %v310 = vld [vmem:[#allocation19 + $0x10] sm:$0xff]
    %v311 = vld [vmem:[#allocation19 + $0x18] sm:$0xff]
    %v312 = vpack.c.bf16 %v253, %v252
    %v313 = vpack.c.bf16 %v309, %v308
    %v314 = vpack.c.bf16 %v311, %v310
    %v316 = vsel %vm264, %v312, 0
    %318 = vmatprep.subr.bf16.mxu0 0
    %319 = vmatpush1.bf16.msra.mxu0 0
    %320 = vmatprep.subr.bf16.mxu0 0
    %321 = vmatpush1.bf16.msra.mxu0 0
    %322 = vmatprep.subr.bf16.mxu0 0
    %323 = vmatpush1.bf16.msra.mxu0 0
    %324 = vmatprep.subr.bf16.mxu0 0
    %325 = vmatpush1.bf16.msra.mxu0 0
    %326 = vmatprep.subr.bf16.mxu0 0
    %327 = vmatpush1.bf16.msra.mxu0 0
    %328 = vmatprep.subr.bf16.mxu0 0
    %329 = vmatpush1.bf16.msra.mxu0 0
    %330 = vmatprep.subr.bf16.mxu0 0
    %331 = vmatpush1.bf16.msra.mxu0 %v314
    %332 = vmatprep.subr.bf16.mxu0 0
    %333 = vmatpush1.bf16.msra.mxu0 %v313
    %334 = vmatprep.subr.bf16.mxu0 0
    %335 = vmatpush2.bf16.msra.mxu0 0
    %336 = vmatprep.subr.bf16.mxu0 0
    %337 = vmatpush2.bf16.msra.mxu0 0
    %338 = vmatprep.subr.bf16.mxu0 0
    %339 = vmatpush2.bf16.msra.mxu0 0
    %340 = vmatprep.subr.bf16.mxu0 0
    %341 = vmatpush2.bf16.msra.mxu0 0
    %342 = vmatprep.subr.bf16.mxu0 0
    %343 = vmatpush2.bf16.msra.mxu0 0
    %344 = vmatprep.subr.bf16.mxu0 0
    %345 = vmatpush2.bf16.msra.mxu0 0
    %346 = vmatprep.subr.bf16.mxu0 0
    %347 = vmatpush2.bf16.msra.mxu0 0
    %348 = vmatprep.subr.bf16.mxu0 0
    %349 = vmatpush2.bf16.msra.mxu0 0
    %350 = vmatprep.mubr.bf16.mxu0 0
    %351 = vmatmul.mubr.bf16.gmra.mxu0 %v316
    %v352 = vpop.f32.mrf.mxu0
    %v353 = vadd.f32 0.0, %v352
    %v354 = vpop.f32.mrf.mxu0
    %v355 = vpop.f32.mrf.mxu0
    %v356 = vadd.f32 0.0, %v355
    %v357 = vpop.f32.mrf.mxu0
    %358 = vdwg.mxu0
    %v359 = vpack.c.bf16 %v303, %v303
    %v362 = vunpack.c.l.b16 %v254
    %v363 = vunpack.c.l.b16 %v255
    %v364 = vpack.c.b16 %v363, %v362
    %367 = vrot.lane.b32.xlu0 %v353, 96
    %v368 = vpop.permute.xlu0 %367
    %369 = vrot.lane.b32.xlu0 %v356, 96
    %v370 = vpop.permute.xlu0 %369
    %vm373 = vcmask 64512
    %v375 = vsel %vm373, %v364, 0
    %vm377 = vcmask 1043456
    %v379 = vsel %vm377, %v359, 0
    %381 = vmatprep.subr.bf16.mxu0 0
    %382 = vmatpush1.bf16.msra.mxu0 0
    %383 = vmatprep.subr.bf16.mxu0 0
    %384 = vmatpush1.bf16.msra.mxu0 0
    %385 = vmatprep.subr.bf16.mxu0 0
    %386 = vmatpush1.bf16.msra.mxu0 0
    %387 = vmatprep.subr.bf16.mxu0 0
    %388 = vmatpush1.bf16.msra.mxu0 0
    %389 = vmatprep.subr.bf16.mxu0 0
    %390 = vmatpush1.bf16.msra.mxu0 0
    %391 = vmatprep.subr.bf16.mxu0 0
    %392 = vmatpush1.bf16.msra.mxu0 0
    %393 = vmatprep.subr.bf16.mxu0 0
    %394 = vmatpush1.bf16.msra.mxu0 0
    %395 = vmatprep.subr.bf16.mxu0 0
    %396 = vmatpush1.bf16.msra.mxu0 %v379
    %397 = vmatprep.subr.bf16.mxu0 0
    %398 = vmatpush2.bf16.msra.mxu0 0
    %399 = vmatprep.subr.bf16.mxu0 0
    %400 = vmatpush2.bf16.msra.mxu0 0
    %401 = vmatprep.subr.bf16.mxu0 0
    %402 = vmatpush2.bf16.msra.mxu0 0
    %403 = vmatprep.subr.bf16.mxu0 0
    %404 = vmatpush2.bf16.msra.mxu0 0
    %405 = vmatprep.subr.bf16.mxu0 0
    %406 = vmatpush2.bf16.msra.mxu0 0
    %407 = vmatprep.subr.bf16.mxu0 0
    %408 = vmatpush2.bf16.msra.mxu0 0
    %409 = vmatprep.subr.bf16.mxu0 0
    %410 = vmatpush2.bf16.msra.mxu0 0
    %411 = vmatprep.subr.bf16.mxu0 0
    %412 = vmatpush2.bf16.msra.mxu0 0
    %413 = vmatprep.mubr.bf16.mxu0 0
    %414 = vmatmul.mubr.bf16.gmra.mxu0 %v375
    %v415 = vpop.f32.mrf.mxu0
    %v416 = vadd.f32 %v368, %v415
    %v417 = vpop.f32.mrf.mxu0
    %v418 = vpop.f32.mrf.mxu0
    %v419 = vadd.f32 %v370, %v418
    %v420 = vpop.f32.mrf.mxu0
    %421 = vdwg.mxu0
    %v422 = vld [vmem:[#allocation20] sm:$0x1]
    %v424 = vlaneseq
    %v425 = vshrl.u32 %v424, 7
    %v426 = vsub.s32 0, %v425
    %v427 = vrot.slane %v422, %v426
    %v429 = vadd.f32 %v416, %v427
    %v430 = vadd.f32 %v419, %v427
    %v431 = vpack.c.bf16 %v356, %v353
    %433 = vrot.lane.b32.xlu0 %v303, 96
    %v434 = vpop.permute.xlu0 %433
    %vm436 = vcmask 130048
    %v438 = vsel %vm436, %v256, 0
    %440 = vmatprep.subr.bf16.mxu0 0
    %441 = vmatpush1.bf16.msra.mxu0 0
    %442 = vmatprep.subr.bf16.mxu0 0
    %443 = vmatpush1.bf16.msra.mxu0 0
    %444 = vmatprep.subr.bf16.mxu0 0
    %445 = vmatpush1.bf16.msra.mxu0 0
    %446 = vmatprep.subr.bf16.mxu0 0
    %447 = vmatpush1.bf16.msra.mxu0 0
    %448 = vmatprep.subr.bf16.mxu0 0
    %449 = vmatpush1.bf16.msra.mxu0 0
    %450 = vmatprep.subr.bf16.mxu0 0
    %451 = vmatpush1.bf16.msra.mxu0 0
    %452 = vmatprep.subr.bf16.mxu0 0
    %453 = vmatpush1.bf16.msra.mxu0 0
    %454 = vmatprep.subr.bf16.mxu0 0
    %455 = vmatpush1.bf16.msra.mxu0 %v431
    %456 = vmatprep.subr.bf16.mxu0 0
    %457 = vmatpush2.bf16.msra.mxu0 0
    %458 = vmatprep.subr.bf16.mxu0 0
    %459 = vmatpush2.bf16.msra.mxu0 0
    %460 = vmatprep.subr.bf16.mxu0 0
    %461 = vmatpush2.bf16.msra.mxu0 0
    %462 = vmatprep.subr.bf16.mxu0 0
    %463 = vmatpush2.bf16.msra.mxu0 0
    %464 = vmatprep.subr.bf16.mxu0 0
    %465 = vmatpush2.bf16.msra.mxu0 0
    %466 = vmatprep.subr.bf16.mxu0 0
    %467 = vmatpush2.bf16.msra.mxu0 0
    %468 = vmatprep.subr.bf16.mxu0 0
    %469 = vmatpush2.bf16.msra.mxu0 0
    %470 = vmatprep.subr.bf16.mxu0 0
    %471 = vmatpush2.bf16.msra.mxu0 0
    %472 = vmatprep.mubr.bf16.mxu0 0
    %473 = vmatmul.mubr.bf16.gmra.mxu0 %v438
    %v474 = vpop.f32.mrf.mxu0
    %v475 = vadd.f32 %v434, %v474
    %v476 = vpop.f32.mrf.mxu0
    %v477 = vpop.f32.mrf.mxu0
    %v478 = vpop.f32.mrf.mxu0
    %479 = vdwg.mxu0
    %v480 = vld [vmem:[#allocation22] sm:$0x1]
    %v482 = vlaneseq
    %v483 = vshrl.u32 %v482, 7
    %v484 = vsub.s32 0, %v483
    %v485 = vrot.slane %v480, %v484
    %v487 = vadd.f32 %v475, %v485
    %v488 = vmax.f32 %v429, 0.0
    %v489 = vmax.f32 %v430, 0.0
    %v490 = vmax.f32 %v487, 0.0
    %v491 = vld [vmem:[%s12] sm:$0xff]
    %v492 = vld [vmem:[%s12 + $0x8] sm:$0xff]
    %v493 = vld [vmem:[%s12 + $0x10] sm:$0xff]
    %v494 = vld [vmem:[%s12 + $0x18] sm:$0xff]
    %v495 = vpack.c.bf16 %v490, %v490
    %v496 = vpack.c.bf16 %v492, %v491
    %v497 = vpack.c.bf16 %v494, %v493
    %v499 = vsel %vm264, %v495, 0
    %501 = vmatprep.subr.bf16.mxu0 0
    %502 = vmatpush1.bf16.msra.mxu0 0
    %503 = vmatprep.subr.bf16.mxu0 0
    %504 = vmatpush1.bf16.msra.mxu0 0
    %505 = vmatprep.subr.bf16.mxu0 0
    %506 = vmatpush1.bf16.msra.mxu0 0
    %507 = vmatprep.subr.bf16.mxu0 0
    %508 = vmatpush1.bf16.msra.mxu0 0
    %509 = vmatprep.subr.bf16.mxu0 0
    %510 = vmatpush1.bf16.msra.mxu0 0
    %511 = vmatprep.subr.bf16.mxu0 0
    %512 = vmatpush1.bf16.msra.mxu0 0
    %513 = vmatprep.subr.bf16.mxu0 0
    %514 = vmatpush1.bf16.msra.mxu0 %v497
    %515 = vmatprep.subr.bf16.mxu0 0
    %516 = vmatpush1.bf16.msra.mxu0 %v496
    %517 = vmatprep.subr.bf16.mxu0 0
    %518 = vmatpush2.bf16.msra.mxu0 0
    %519 = vmatprep.subr.bf16.mxu0 0
    %520 = vmatpush2.bf16.msra.mxu0 0
    %521 = vmatprep.subr.bf16.mxu0 0
    %522 = vmatpush2.bf16.msra.mxu0 0
    %523 = vmatprep.subr.bf16.mxu0 0
    %524 = vmatpush2.bf16.msra.mxu0 0
    %525 = vmatprep.subr.bf16.mxu0 0
    %526 = vmatpush2.bf16.msra.mxu0 0
    %527 = vmatprep.subr.bf16.mxu0 0
    %528 = vmatpush2.bf16.msra.mxu0 0
    %529 = vmatprep.subr.bf16.mxu0 0
    %530 = vmatpush2.bf16.msra.mxu0 0
    %531 = vmatprep.subr.bf16.mxu0 0
    %532 = vmatpush2.bf16.msra.mxu0 0
    %533 = vmatprep.mubr.bf16.mxu0 0
    %534 = vmatmul.mubr.bf16.gmra.mxu0 %v499
    %v535 = vpop.f32.mrf.mxu0
    %v536 = vadd.f32 0.0, %v535
    %v537 = vpop.f32.mrf.mxu0
    %v538 = vpop.f32.mrf.mxu0
    %v539 = vpop.f32.mrf.mxu0
    %540 = vdwg.mxu0
    %v541 = vld [vmem:[#allocation23] sm:$0xff]
    %v542 = vld [vmem:[#allocation23 + $0x8] sm:$0xff]
    %v543 = vld [vmem:[#allocation23 + $0x10] sm:$0xff]
    %v544 = vld [vmem:[#allocation23 + $0x18] sm:$0xff]
    %v545 = vpack.c.bf16 %v489, %v488
    %v546 = vpack.c.bf16 %v542, %v541
    %v547 = vpack.c.bf16 %v544, %v543
    %v549 = vsel %vm264, %v545, 0
    %551 = vmatprep.subr.bf16.mxu0 0
    %552 = vmatpush1.bf16.msra.mxu0 0
    %553 = vmatprep.subr.bf16.mxu0 0
    %554 = vmatpush1.bf16.msra.mxu0 0
    %555 = vmatprep.subr.bf16.mxu0 0
    %556 = vmatpush1.bf16.msra.mxu0 0
    %557 = vmatprep.subr.bf16.mxu0 0
    %558 = vmatpush1.bf16.msra.mxu0 0
    %559 = vmatprep.subr.bf16.mxu0 0
    %560 = vmatpush1.bf16.msra.mxu0 0
    %561 = vmatprep.subr.bf16.mxu0 0
    %562 = vmatpush1.bf16.msra.mxu0 0
    %563 = vmatprep.subr.bf16.mxu0 0
    %564 = vmatpush1.bf16.msra.mxu0 %v547
    %565 = vmatprep.subr.bf16.mxu0 0
    %566 = vmatpush1.bf16.msra.mxu0 %v546
    %567 = vmatprep.subr.bf16.mxu0 0
    %568 = vmatpush2.bf16.msra.mxu0 0
    %569 = vmatprep.subr.bf16.mxu0 0
    %570 = vmatpush2.bf16.msra.mxu0 0
    %571 = vmatprep.subr.bf16.mxu0 0
    %572 = vmatpush2.bf16.msra.mxu0 0
    %573 = vmatprep.subr.bf16.mxu0 0
    %574 = vmatpush2.bf16.msra.mxu0 0
    %575 = vmatprep.subr.bf16.mxu0 0
    %576 = vmatpush2.bf16.msra.mxu0 0
    %577 = vmatprep.subr.bf16.mxu0 0
    %578 = vmatpush2.bf16.msra.mxu0 0
    %579 = vmatprep.subr.bf16.mxu0 0
    %580 = vmatpush2.bf16.msra.mxu0 0
    %581 = vmatprep.subr.bf16.mxu0 0
    %582 = vmatpush2.bf16.msra.mxu0 0
    %583 = vmatprep.mubr.bf16.mxu0 0
    %584 = vmatmul.mubr.bf16.gmra.mxu0 %v549
    %v585 = vpop.f32.mrf.mxu0
    %v586 = vadd.f32 0.0, %v585
    %v587 = vpop.f32.mrf.mxu0
    %v588 = vpop.f32.mrf.mxu0
    %v589 = vadd.f32 0.0, %v588
    %v590 = vpop.f32.mrf.mxu0
    %591 = vdwg.mxu0
    %v592 = vpack.c.bf16 %v536, %v536
    %595 = vrot.lane.b32.xlu0 %v586, 96
    %v596 = vpop.permute.xlu0 %595
    %597 = vrot.lane.b32.xlu0 %v589, 96
    %v598 = vpop.permute.xlu0 %597
    %v602 = vsel %vm377, %v592, 0
    %604 = vmatprep.subr.bf16.mxu0 0
    %605 = vmatpush1.bf16.msra.mxu0 0
    %606 = vmatprep.subr.bf16.mxu0 0
    %607 = vmatpush1.bf16.msra.mxu0 0
    %608 = vmatprep.subr.bf16.mxu0 0
    %609 = vmatpush1.bf16.msra.mxu0 0
    %610 = vmatprep.subr.bf16.mxu0 0
    %611 = vmatpush1.bf16.msra.mxu0 0
    %612 = vmatprep.subr.bf16.mxu0 0
    %613 = vmatpush1.bf16.msra.mxu0 0
    %614 = vmatprep.subr.bf16.mxu0 0
    %615 = vmatpush1.bf16.msra.mxu0 0
    %616 = vmatprep.subr.bf16.mxu0 0
    %617 = vmatpush1.bf16.msra.mxu0 0
    %618 = vmatprep.subr.bf16.mxu0 0
    %619 = vmatpush1.bf16.msra.mxu0 %v602
    %620 = vmatprep.subr.bf16.mxu0 0
    %621 = vmatpush2.bf16.msra.mxu0 0
    %622 = vmatprep.subr.bf16.mxu0 0
    %623 = vmatpush2.bf16.msra.mxu0 0
    %624 = vmatprep.subr.bf16.mxu0 0
    %625 = vmatpush2.bf16.msra.mxu0 0
    %626 = vmatprep.subr.bf16.mxu0 0
    %627 = vmatpush2.bf16.msra.mxu0 0
    %628 = vmatprep.subr.bf16.mxu0 0
    %629 = vmatpush2.bf16.msra.mxu0 0
    %630 = vmatprep.subr.bf16.mxu0 0
    %631 = vmatpush2.bf16.msra.mxu0 0
    %632 = vmatprep.subr.bf16.mxu0 0
    %633 = vmatpush2.bf16.msra.mxu0 0
    %634 = vmatprep.subr.bf16.mxu0 0
    %635 = vmatpush2.bf16.msra.mxu0 0
    %636 = vmatprep.mubr.bf16.mxu0 0
    %637 = vmatmul.mubr.bf16.gmra.mxu0 %v375
    %v638 = vpop.f32.mrf.mxu0
    %v639 = vadd.f32 %v596, %v638
    %v640 = vpop.f32.mrf.mxu0
    %v641 = vpop.f32.mrf.mxu0
    %v642 = vadd.f32 %v598, %v641
    %v643 = vpop.f32.mrf.mxu0
    %644 = vdwg.mxu0
    %v645 = vld [vmem:[%s14] sm:$0x1]
    %v647 = vlaneseq
    %v648 = vshrl.u32 %v647, 7
    %v649 = vsub.s32 0, %v648
    %v650 = vrot.slane %v645, %v649
    %v652 = vadd.f32 %v639, %v650
    %v653 = vadd.f32 %v642, %v650
    %v654 = vpack.c.bf16 %v589, %v586
    %656 = vrot.lane.b32.xlu0 %v536, 96
    %v657 = vpop.permute.xlu0 %656
    %659 = vmatprep.subr.bf16.mxu0 0
    %660 = vmatpush1.bf16.msra.mxu0 0
    %661 = vmatprep.subr.bf16.mxu0 0
    %662 = vmatpush1.bf16.msra.mxu0 0
    %663 = vmatprep.subr.bf16.mxu0 0
    %664 = vmatpush1.bf16.msra.mxu0 0
    %665 = vmatprep.subr.bf16.mxu0 0
    %666 = vmatpush1.bf16.msra.mxu0 0
    %667 = vmatprep.subr.bf16.mxu0 0
    %668 = vmatpush1.bf16.msra.mxu0 0
    %669 = vmatprep.subr.bf16.mxu0 0
    %670 = vmatpush1.bf16.msra.mxu0 0
    %671 = vmatprep.subr.bf16.mxu0 0
    %672 = vmatpush1.bf16.msra.mxu0 0
    %673 = vmatprep.subr.bf16.mxu0 0
    %674 = vmatpush1.bf16.msra.mxu0 %v654
    %675 = vmatprep.subr.bf16.mxu0 0
    %676 = vmatpush2.bf16.msra.mxu0 0
    %677 = vmatprep.subr.bf16.mxu0 0
    %678 = vmatpush2.bf16.msra.mxu0 0
    %679 = vmatprep.subr.bf16.mxu0 0
    %680 = vmatpush2.bf16.msra.mxu0 0
    %681 = vmatprep.subr.bf16.mxu0 0
    %682 = vmatpush2.bf16.msra.mxu0 0
    %683 = vmatprep.subr.bf16.mxu0 0
    %684 = vmatpush2.bf16.msra.mxu0 0
    %685 = vmatprep.subr.bf16.mxu0 0
    %686 = vmatpush2.bf16.msra.mxu0 0
    %687 = vmatprep.subr.bf16.mxu0 0
    %688 = vmatpush2.bf16.msra.mxu0 0
    %689 = vmatprep.subr.bf16.mxu0 0
    %690 = vmatpush2.bf16.msra.mxu0 0
    %691 = vmatprep.mubr.bf16.mxu0 0
    %692 = vmatmul.mubr.bf16.gmra.mxu0 %v438
    %v693 = vpop.f32.mrf.mxu0
    %v694 = vadd.f32 %v657, %v693
    %v695 = vpop.f32.mrf.mxu0
    %v696 = vpop.f32.mrf.mxu0
    %v697 = vpop.f32.mrf.mxu0
    %698 = vdwg.mxu0
    %v699 = vld [vmem:[%s15] sm:$0x1]
    %v701 = vlaneseq
    %v702 = vshrl.u32 %v701, 7
    %v703 = vsub.s32 0, %v702
    %v704 = vrot.slane %v699, %v703
    %v706 = vadd.f32 %v694, %v704
    %707 = vst.msk [vmem:[#allocation2] sm:$0xff] %vm264, %v706
    %708 = vst.msk [vmem:[#allocation3] sm:$0xff] %vm264, %v652
    %709 = vst.msk [vmem:[#allocation3 + $0x8] sm:$0xff] %vm264, %v653
    %710 = vst.msk [vmem:[#allocation4] sm:$0xff] %vm264, 0.0
    %711 = vst.msk [vmem:[#allocation4 + $0x8] sm:$0xff] %vm264, 0.0
    %712 = vst.msk [vmem:[#allocation4 + $0x10] sm:$0xff] %vm264, 0.0
    %713 = vst.msk [vmem:[#allocation4 + $0x18] sm:$0xff] %vm264, 0.0
    %714 = vst.msk [vmem:[#allocation4 + $0x20] sm:$0xff] %vm264, 0.0
    %715 = vst.msk [vmem:[#allocation4 + $0x28] sm:$0xff] %vm264, 0.0
    %716 = vst.msk [vmem:[#allocation4 + $0x30] sm:$0xff] %vm264, 0.0
    %717 = vst.msk [vmem:[#allocation4 + $0x38] sm:$0xff] %vm264, 0.0
    %718 = vst.msk [vmem:[#allocation4 + $0x40] sm:$0xff] %vm264, 0.0
    %719 = vst.msk [vmem:[#allocation4 + $0x48] sm:$0xff] %vm264, 0.0
    %720 = vst.msk [vmem:[#allocation4 + $0x50] sm:$0xff] %vm264, 0.0
    %721 = vst.msk [vmem:[#allocation4 + $0x58] sm:$0xff] %vm264, 0.0
    %722 = vst.msk [vmem:[#allocation4 + $0x60] sm:$0xff] %vm264, 0.0
    %723 = vst.msk [vmem:[#allocation4 + $0x68] sm:$0xff] %vm264, 0.0
    %724 = vst.msk [vmem:[#allocation4 + $0x70] sm:$0xff] %vm264, 0.0
    %725 = vst.msk [vmem:[#allocation4 + $0x78] sm:$0xff] %vm264, 0.0
    %726 = vst.msk [vmem:[#allocation5] sm:$0xff] %vm264, 0.0
    %727 = vst.msk [vmem:[#allocation5 + $0x8] sm:$0xff] %vm264, 0.0
    %728 = vst.msk [vmem:[#allocation5 + $0x10] sm:$0xff] %vm264, 0.0
    %729 = vst.msk [vmem:[#allocation5 + $0x18] sm:$0xff] %vm264, 0.0
    %730 = vst.msk [vmem:[#allocation5 + $0x20] sm:$0xff] %vm264, 0.0
    %731 = vst.msk [vmem:[#allocation5 + $0x28] sm:$0xff] %vm264, 0.0
    %732 = vst.msk [vmem:[#allocation5 + $0x30] sm:$0xff] %vm264, 0.0
    %733 = vst.msk [vmem:[#allocation5 + $0x38] sm:$0xff] %vm264, 0.0
    %734 = vst.msk [vmem:[#allocation5 + $0x40] sm:$0xff] %vm264, 0.0
    %735 = vst.msk [vmem:[#allocation5 + $0x48] sm:$0xff] %vm264, 0.0
    %736 = vst.msk [vmem:[#allocation5 + $0x50] sm:$0xff] %vm264, 0.0
    %737 = vst.msk [vmem:[#allocation5 + $0x58] sm:$0xff] %vm264, 0.0
    %738 = vst.msk [vmem:[#allocation5 + $0x60] sm:$0xff] %vm264, 0.0
    %739 = vst.msk [vmem:[#allocation5 + $0x68] sm:$0xff] %vm264, 0.0
    %740 = vst.msk [vmem:[#allocation5 + $0x70] sm:$0xff] %vm264, 0.0
    %741 = vst.msk [vmem:[#allocation5 + $0x78] sm:$0xff] %vm264, 0.0
    loop: start=0, step=1, limit=8
    $region102: #{tpu_custom_call.1} parent=1 // loop_pre_header
      _
    $region103: #{tpu_custom_call.1} parent=1 // loop_header
      %s743 = sphi 0, %s747
      %p744 = scmp.ge.s32.totalorder %s743, 8
    $region104: #{tpu_custom_call.1} parent=1 // loop_header_branch
      %746 = sbr.rel (%p744) target = $region108
    $region105: #{tpu_custom_call.1} parent=1 // loop_body
      %s748 = sld [smem:[#allocation7 + %s743]]
      %s749 = sshra.s32 %s743, 7
      %s750 = sand.u32 %s743, 127
      %s751 = sadd.s32 %s749, 1
      %s752 = smul.u32 %s751, 128
      %s753 = sshra.s32 %s743, 7
      %s754 = sand.u32 %s743, 127
      %s755 = sadd.s32 %s752, %s754
      %s756 = sld [smem:[#allocation7 + %s755]]
      %s757 = scalar_lea.vmem [#allocation2], %s748
      %v758 = vld [vmem:[%s757] sm:$0x1]
      %s759 = scalar_lea.vmem [#allocation4], %s743
      %vm760 = vcmask 253952
      %761 = vst.msk [vmem:[%s759] sm:$0x1] %vm760, %v758
      %s762 = scalar_lea.vmem [#allocation3], %s756
      %v763 = vld [vmem:[%s762] sm:$0x1]
      %s764 = scalar_lea.vmem [#allocation5], %s743
      %765 = vst.msk [vmem:[%s764] sm:$0x1] %vm760, %v763
    $region106: #{tpu_custom_call.1} parent=1 // loop_footer
      %s747 = sadd.s32 1, %s743
    $region107: #{tpu_custom_call.1} parent=1 // loop_footer_branch
      %742 = sbr.rel target = $region103
    $region108: #{tpu_custom_call.1} parent=1 // loop_exit
      _
    %v766 = vld [vmem:[#allocation4] sm:$0xff]
    %v767 = vld [vmem:[#allocation4 + $0x8] sm:$0xff]
    %v768 = vld [vmem:[#allocation4 + $0x10] sm:$0xff]
    %v769 = vld [vmem:[#allocation4 + $0x18] sm:$0xff]
    %v770 = vld [vmem:[#allocation4 + $0x20] sm:$0xff]
    %v771 = vld [vmem:[#allocation4 + $0x28] sm:$0xff]
    %v772 = vld [vmem:[#allocation4 + $0x30] sm:$0xff]
    %v773 = vld [vmem:[#allocation4 + $0x38] sm:$0xff]
    %v774 = vld [vmem:[#allocation4 + $0x40] sm:$0xff]
    %v775 = vld [vmem:[#allocation4 + $0x48] sm:$0xff]
    %v776 = vld [vmem:[#allocation4 + $0x50] sm:$0xff]
    %v777 = vld [vmem:[#allocation4 + $0x58] sm:$0xff]
    %v778 = vld [vmem:[#allocation4 + $0x60] sm:$0xff]
    %v779 = vld [vmem:[#allocation4 + $0x68] sm:$0xff]
    %v780 = vld [vmem:[#allocation4 + $0x70] sm:$0xff]
    %v781 = vld [vmem:[#allocation4 + $0x78] sm:$0xff]
    %v782 = vld [vmem:[#allocation5] sm:$0xff]
    %v783 = vld [vmem:[#allocation5 + $0x8] sm:$0xff]
    %v784 = vld [vmem:[#allocation5 + $0x10] sm:$0xff]
    %v785 = vld [vmem:[#allocation5 + $0x18] sm:$0xff]
    %v786 = vld [vmem:[#allocation5 + $0x20] sm:$0xff]
    %v787 = vld [vmem:[#allocation5 + $0x28] sm:$0xff]
    %v788 = vld [vmem:[#allocation5 + $0x30] sm:$0xff]
    %v789 = vld [vmem:[#allocation5 + $0x38] sm:$0xff]
    %v790 = vld [vmem:[#allocation5 + $0x40] sm:$0xff]
    %v791 = vld [vmem:[#allocation5 + $0x48] sm:$0xff]
    %v792 = vld [vmem:[#allocation5 + $0x50] sm:$0xff]
    %v793 = vld [vmem:[#allocation5 + $0x58] sm:$0xff]
    %v794 = vld [vmem:[#allocation5 + $0x60] sm:$0xff]
    %v795 = vld [vmem:[#allocation5 + $0x68] sm:$0xff]
    %v796 = vld [vmem:[#allocation5 + $0x70] sm:$0xff]
    %v797 = vld [vmem:[#allocation5 + $0x78] sm:$0xff]
    %v798 = vmul.f32 %v766, %v782
    %v799 = vmul.f32 %v767, %v783
    %v800 = vmul.f32 %v768, %v784
    %v801 = vmul.f32 %v769, %v785
    %v802 = vmul.f32 %v770, %v786
    %v803 = vmul.f32 %v771, %v787
    %v804 = vmul.f32 %v772, %v788
    %v805 = vmul.f32 %v773, %v789
    %v806 = vmul.f32 %v774, %v790
    %v807 = vmul.f32 %v775, %v791
    %v808 = vmul.f32 %v776, %v792
    %v809 = vmul.f32 %v777, %v793
    %v810 = vmul.f32 %v778, %v794
    %v811 = vmul.f32 %v779, %v795
    %v812 = vmul.f32 %v780, %v796
    %v813 = vmul.f32 %v781, %v797
    %v815 = vsel %vm264, 1.0, 0
    %v818 = vsel %vm264, %v798, 0
    %v821 = vsel %vm264, %v799, 0
    %v824 = vsel %vm264, %v800, 0
    %v827 = vsel %vm264, %v801, 0
    %v830 = vsel %vm264, %v802, 0
    %v833 = vsel %vm264, %v803, 0
    %v836 = vsel %vm264, %v804, 0
    %v839 = vsel %vm264, %v805, 0
    %v842 = vsel %vm264, %v806, 0
    %v845 = vsel %vm264, %v807, 0
    %v848 = vsel %vm264, %v808, 0
    %v851 = vsel %vm264, %v809, 0
    %v854 = vsel %vm264, %v810, 0
    %v857 = vsel %vm264, %v811, 0
    %v860 = vsel %vm264, %v812, 0
    %v863 = vsel %vm264, %v813, 0
    %865 = vmatprep.subr.mxu0 0.0
    %866 = vmatpush1.xpose.msra.mxu0 %v863
    %867 = vmatprep.subr.mxu0 0.0
    %868 = vmatpush1.xpose.msra.mxu0 %v860
    %869 = vmatprep.subr.mxu0 0.0
    %870 = vmatpush1.xpose.msra.mxu0 %v857
    %871 = vmatprep.subr.mxu0 0.0
    %872 = vmatpush1.xpose.msra.mxu0 %v854
    %873 = vmatprep.subr.mxu0 0.0
    %874 = vmatpush1.xpose.msra.mxu0 %v851
    %875 = vmatprep.subr.mxu0 0.0
    %876 = vmatpush1.xpose.msra.mxu0 %v848
    %877 = vmatprep.subr.mxu0 0.0
    %878 = vmatpush1.xpose.msra.mxu0 %v845
    %879 = vmatprep.subr.mxu0 0.0
    %880 = vmatpush1.xpose.msra.mxu0 %v842
    %881 = vmatprep.subr.mxu0 0.0
    %882 = vmatpush1.xpose.msra.mxu0 %v839
    %883 = vmatprep.subr.mxu0 0.0
    %884 = vmatpush1.xpose.msra.mxu0 %v836
    %885 = vmatprep.subr.mxu0 0.0
    %886 = vmatpush1.xpose.msra.mxu0 %v833
    %887 = vmatprep.subr.mxu0 0.0
    %888 = vmatpush1.xpose.msra.mxu0 %v830
    %889 = vmatprep.subr.mxu0 0.0
    %890 = vmatpush1.xpose.msra.mxu0 %v827
    %891 = vmatprep.subr.mxu0 0.0
    %892 = vmatpush1.xpose.msra.mxu0 %v824
    %893 = vmatprep.subr.mxu0 0.0
    %894 = vmatpush1.xpose.msra.mxu0 %v821
    %895 = vmatprep.subr.mxu0 0.0
    %896 = vmatpush1.xpose.msra.mxu0 %v818
    %897 = vmatprep.subr.mxu0 0.0
    %898 = vmatpush2.xpose.msra.mxu0 0.0
    %899 = vmatprep.subr.mxu0 0.0
    %900 = vmatpush2.xpose.msra.mxu0 0.0
    %901 = vmatprep.subr.mxu0 0.0
    %902 = vmatpush2.xpose.msra.mxu0 0.0
    %903 = vmatprep.subr.mxu0 0.0
    %904 = vmatpush2.xpose.msra.mxu0 0.0
    %905 = vmatprep.subr.mxu0 0.0
    %906 = vmatpush2.xpose.msra.mxu0 0.0
    %907 = vmatprep.subr.mxu0 0.0
    %908 = vmatpush2.xpose.msra.mxu0 0.0
    %909 = vmatprep.subr.mxu0 0.0
    %910 = vmatpush2.xpose.msra.mxu0 0.0
    %911 = vmatprep.subr.mxu0 0.0
    %912 = vmatpush2.xpose.msra.mxu0 0.0
    %913 = vmatprep.subr.mxu0 0.0
    %914 = vmatpush2.xpose.msra.mxu0 0.0
    %915 = vmatprep.subr.mxu0 0.0
    %916 = vmatpush2.xpose.msra.mxu0 0.0
    %917 = vmatprep.subr.mxu0 0.0
    %918 = vmatpush2.xpose.msra.mxu0 0.0
    %919 = vmatprep.subr.mxu0 0.0
    %920 = vmatpush2.xpose.msra.mxu0 0.0
    %921 = vmatprep.subr.mxu0 0.0
    %922 = vmatpush2.xpose.msra.mxu0 0.0
    %923 = vmatprep.subr.mxu0 0.0
    %924 = vmatpush2.xpose.msra.mxu0 0.0
    %925 = vmatprep.subr.mxu0 0.0
    %926 = vmatpush2.xpose.msra.mxu0 0.0
    %927 = vmatprep.subr.mxu0 0.0
    %928 = vmatpush2.xpose.msra.mxu0 0.0
    %929 = vmatprep.mubr.f32.mxu0 0.0
    %930 = vmatmul.mubr.f32.gmra.mxu0 %v815
    %v931 = vpop.f32.mrf.mxu0
    %v932 = vadd.f32 0.0, %v931
    %v933 = vpop.f32.mrf.mxu0
    %934 = vdwg.mxu0
    %935 = vst [vmem:[#allocation25] sm:$0x1] %v932
    // Predicated region
    $region109: #{tpu_custom_call.1} parent=1 // pred_check
      _
    $region110: #{tpu_custom_call.1} parent=1 // pred_check_branch
      %937 = sbr.rel (0) target = $region112
    $region111: #{tpu_custom_call.1} parent=1 // pred_region
      %s939 = ssub.s32 16, 16
      %940 = vsyncadd [#allocation10], %s939
      %s942 = sshll.u32 [#allocation25], 4
      %s943 = int_to_ptr.vmem [resolvable:$true] %s942
      %945 = dma.vmem_to_hbm [thread:$0]  %s943, 16, %s16, [#allocation10]
    $region112: #{tpu_custom_call.1} parent=1 // pred_fallthru
      _
    // Predicated region
    $region113: #{tpu_custom_call.1} parent=1 // pred_check
      _
    $region114: #{tpu_custom_call.1} parent=1 // pred_check_branch
      %947 = sbr.rel (0) target = $region116
    $region115: #{tpu_custom_call.1} parent=1 // pred_region
      %948 = dma.done [#allocation10], 16
    $region116: #{tpu_custom_call.1} parent=1 // pred_fallthru
      _
    %949 = vsyncpa [#allocation9], 1
    %950 = vsyncpa [#allocation12], 1
    %951 = vsyncpa [#allocation15], 1
    %952 = vsyncpa [#allocation18], 1
    %953 = vsyncpa [#allocation21], 1
    %954 = vsyncpa [#allocation24], 1
    %955 = vsyncpa [#allocation10], 1

</llo_original>
